<compile_context>
chip_gen: v5e
topology: v5e:2x2
jax: 0.10.0
libtpu: 0.0.40
codegen_flags: <defaults>
</compile_context>

<pallas_src>
import functools

import jax
import jax.numpy as jnp
import numpy as np
from jax import lax
from jax.experimental import pallas as pl
from jax.experimental.pallas import tpu as pltpu


def _spatial_attn_kernel(wr_ref, wi_ref, xr_ref, xi_ref, or_ref, oi_ref,
                         sum_r, sum_i, mx_r, mx_i, *, ksize, H, W, C_total):
    """Grid = (batch blocks, channel blocks); channel axis is a reduction (last, arbitrary).

    wr_ref, wi_ref : SMEM (2*k*k,) flattened real/imag conv weights (output channel squeezed)
    xr_ref, xi_ref : VMEM (Bblk, Cblk, H*W) real/imag input block (spatial flattened)
    or_ref, oi_ref : VMEM (Bblk, 1, H*W) real/imag output block
    sum_*, mx_*    : VMEM (Bblk, H*W) running channel-sum / channel-max scratch
    """
    c_idx = pl.program_id(1)
    n_c = pl.num_programs(1)
    HW = H * W
    pad = ksize // 2

    xr = xr_ref[...]                      # (Bblk, Cblk, HW)
    xi = xi_ref[...]
    bblk = xr.shape[0]

    # ---- running channel reductions (sum for the mean; max of real/imag separately) ----
    @pl.when(c_idx == 0)
    def _():
        sum_r[...] = jnp.zeros_like(sum_r)
        sum_i[...] = jnp.zeros_like(sum_i)
        mx_r[...] = jnp.full(mx_r.shape, -jnp.inf, mx_r.dtype)
        mx_i[...] = jnp.full(mx_i.shape, -jnp.inf, mx_i.dtype)

    sum_r[...] += jnp.sum(xr, axis=1)
    sum_i[...] += jnp.sum(xi, axis=1)
    mx_r[...] = jnp.maximum(mx_r[...], jnp.max(xr, axis=1))
    mx_i[...] = jnp.maximum(mx_i[...], jnp.max(xi, axis=1))

    # ---- last channel step: complex conv via roll+mask taps, then complex sigmoid ----
    @pl.when(c_idx == n_c - 1)
    def _():
        inv_c = 1.0 / float(C_total)
        feat = (
            (sum_r[...] * inv_c, sum_i[...] * inv_c),   # conv channel 0: complex mean
            (mx_r[...], mx_i[...]),                     # conv channel 1: complex "max"
        )

        # Flattened-layout boundary indices (hoisted out of the tap loops).
        p = lax.broadcasted_iota(jnp.int32, (bblk, HW), 1)   # flat spatial index i*W + j
        col = p % W                                          # column index j

        acc_r = jnp.zeros((bblk, HW), jnp.float32)
        acc_i = jnp.zeros((bblk, HW), jnp.float32)

        for di in range(-pad, pad + 1):
            if di < 0:
                row_ok = p >= (-di) * W
            elif di > 0:
                row_ok = p < (H - di) * W
            else:
                row_ok = None
            for dj in range(-pad, pad + 1):
                if dj < 0:
                    col_ok = col >= -dj
                elif dj > 0:
                    col_ok = col < W - dj
                else:
                    col_ok = None
                if row_ok is None:
                    mask = col_ok
                elif col_ok is None:
                    mask = row_ok
                else:
                    mask = jnp.logical_and(row_ok, col_ok)

                # tap(di, dj)[p] == feat[p + di*W + dj] where in-bounds, else 0.
                shift = (-(di * W + dj)) % HW

                def tap(g, _shift=shift, _mask=mask):
                    t = pltpu.roll(g, shift=_shift, axis=1) if _shift else g
                    return t if _mask is None else jnp.where(_mask, t, 0.0)

                for ch, (g_r, g_i) in enumerate(feat):
                    widx = ch * ksize * ksize + (di + pad) * ksize + (dj + pad)
                    wr = wr_ref[widx]                    # scalar weights from SMEM
                    wi = wi_ref[widx]
                    t_r = tap(g_r)
                    t_i = tap(g_i)
                    acc_r = acc_r + wr * t_r - wi * t_i
                    acc_i = acc_i + wr * t_i + wi * t_r

        # TODO(synk): when used as CBAM gating, fuse the downstream x * attention multiply
        # here (x is already resident in VMEM) to halve HBM traffic; the module itself only
        # returns the attention map, so we keep its exact output.
        or_ref[:, 0, :] = jax.nn.sigmoid(acc_r)
        oi_ref[:, 0, :] = jax.nn.sigmoid(acc_i)


def _choose_block_sizes(B, C, HW):
    """Pick (Bblk, Cblk) so the double-buffered per-step working set stays small (v7x-safe)."""
    if C <= 32:
        cblk = C
    else:
        cblk = next((c for c in (32, 24, 16, 8) if C % c == 0), C)
    budget = 8 << 20                                    # ~8 MiB/step: fits v7x 32 MiB scoped
    bytes_per_b = 4 * HW * (2 * 2 * cblk + 2 * 2 + 4)   # dbl-buffered ins/outs + scratch, f32
    bblk = max(1, min(B, budget // max(bytes_per_b, 1)))
    while bblk > 1 and B // bblk < 2:                   # keep >=2 batch steps (v7x megacore)
        bblk -= 1
    while B % bblk:                                     # grid must divide evenly
        bblk -= 1
    return bblk, cblk


def complex_spatial_attention(x_real, x_imag, w_real, w_imag, kernel_size):
    """x_real/x_imag: (B, C, H, W) f32.  w_real/w_imag: (2, k, k) f32 (output channel squeezed)."""
    B, C, H, W = x_real.shape
    HW = H * W

    # Lane-dense layout: flatten spatial dims so the last (lane) dim is H*W.
    xr = x_real.reshape(B, C, HW).astype(jnp.float32)
    xi = x_imag.reshape(B, C, HW).astype(jnp.float32)
    wr_flat = w_real.reshape(-1).astype(jnp.float32)
    wi_flat = w_imag.reshape(-1).astype(jnp.float32)

    bblk, cblk = _choose_block_sizes(B, C, HW)
    grid = (B // bblk, C // cblk)

    kernel = functools.partial(_spatial_attn_kernel, ksize=kernel_size, H=H, W=W, C_total=C)

    smem_spec = pl.BlockSpec(memory_space=pltpu.MemorySpace.SMEM)
    x_spec = pl.BlockSpec((bblk, cblk, HW), lambda b, c: (b, c, 0))
    o_spec = pl.BlockSpec((bblk, 1, HW), lambda b, c: (b, 0, 0))

    out_r, out_i = pl.pallas_call(
        kernel,
        out_shape=(
            jax.ShapeDtypeStruct((B, 1, HW), jnp.float32),
            jax.ShapeDtypeStruct((B, 1, HW), jnp.float32),
        ),
        grid_spec=pltpu.PrefetchScalarGridSpec(
            num_scalar_prefetch=0,
            grid=grid,
            in_specs=[smem_spec, smem_spec, x_spec, x_spec],
            out_specs=[o_spec, o_spec],
            scratch_shapes=[pltpu.VMEM((bblk, HW), jnp.float32) for _ in range(4)],
        ),
        compiler_params=pltpu.CompilerParams(
            dimension_semantics=("parallel", "arbitrary"),
            vmem_limit_bytes=32 * 1024 * 1024,
        ),
    )(wr_flat, wi_flat, xr, xi)

    return out_r.reshape(B, 1, H, W), out_i.reshape(B, 1, H, W)


def reference(x_real, x_imag, w_real, w_imag):
    """Pure-JAX reference mirroring the PyTorch forward."""
    avg_r = jnp.mean(x_real, axis=1, keepdims=True)
    avg_i = jnp.mean(x_imag, axis=1, keepdims=True)
    max_r = jnp.max(x_real, axis=1, keepdims=True)
    max_i = jnp.max(x_imag, axis=1, keepdims=True)
    feat_r = jnp.concatenate([avg_r, max_r], axis=1)  # (B, 2, H, W)
    feat_i = jnp.concatenate([avg_i, max_i], axis=1)

    def conv(f, w):
        return lax.conv_general_dilated(
            f, w[None],  # (1, 2, k, k)
            window_strides=(1, 1), padding="SAME",
            dimension_numbers=("NCHW", "OIHW", "NCHW"))

    y_r = conv(feat_r, w_real) - conv(feat_i, w_imag)
    y_i = conv(feat_i, w_real) + conv(feat_r, w_imag)
    return jax.nn.sigmoid(y_r), jax.nn.sigmoid(y_i)


if __name__ == "__main__":
    B, C, H, W = 2, 4, 16, 16
    KERNEL_SIZE = 3

    key = jax.random.PRNGKey(0)
    k_xr, k_xi, k_wr, k_wi = jax.random.split(key, 4)

    x_real = jax.random.normal(k_xr, (B, C, H, W), dtype=jnp.float32)
    x_imag = jax.random.normal(k_xi, (B, C, H, W), dtype=jnp.float32)

    # ComplexConv2d(2, 1, k, bias=False): two real conv weights of shape (1, 2, k, k);
    # squeeze the single output channel -> (2, k, k).
    fan_in = 2 * KERNEL_SIZE * KERNEL_SIZE
    scale = 1.0 / np.sqrt(fan_in)
    w_real = jax.random.uniform(k_wr, (2, KERNEL_SIZE, KERNEL_SIZE),
                                minval=-scale, maxval=scale, dtype=jnp.float32)
    w_imag = jax.random.uniform(k_wi, (2, KERNEL_SIZE, KERNEL_SIZE),
                                minval=-scale, maxval=scale, dtype=jnp.float32)

    out_r, out_i = complex_spatial_attention(x_real, x_imag, w_real, w_imag, KERNEL_SIZE)
    jax.block_until_ready((out_r, out_i))

    ref_r, ref_i = reference(x_real, x_imag, w_real, w_imag)
    np.testing.assert_allclose(np.asarray(out_r), np.asarray(ref_r), rtol=1e-5, atol=1e-5)
    np.testing.assert_allclose(np.asarray(out_i), np.asarray(ref_i), rtol=1e-5, atol=1e-5)

    print("KERNEL_OK")
</pallas_src>

<mosaic_0001>
module attributes {stable_mosaic.version = 11 : i64} {
  func.func @_spatial_attn_kernel(%arg0: i32, %arg1: i32, %arg2: memref<18xf32, #tpu.memory_space<smem>>, %arg3: memref<18xf32, #tpu.memory_space<smem>>, %arg4: memref<1x4x256xf32, #tpu.memory_space<vmem>>, %arg5: memref<1x4x256xf32, #tpu.memory_space<vmem>>, %arg6: memref<1x1x256xf32, #tpu.memory_space<vmem>>, %arg7: memref<1x1x256xf32, #tpu.memory_space<vmem>>, %arg8: memref<1x256xf32, #tpu.memory_space<vmem>>, %arg9: memref<1x256xf32, #tpu.memory_space<vmem>>, %arg10: memref<1x256xf32, #tpu.memory_space<vmem>>, %arg11: memref<1x256xf32, #tpu.memory_space<vmem>>) attributes {dimension_semantics = [#tpu.dimension_semantics<parallel>, #tpu.dimension_semantics<arbitrary>], iteration_bounds = array<i64: 2, 1>, scalar_prefetch = 0 : i64, scratch_operands = 4 : i64, tpu.core_type = #tpu.core_type<tc>, window_params = [{transform_indices = @transform_0, window_bounds = array<i64: 18>}, {transform_indices = @transform_1, window_bounds = array<i64: 18>}, {transform_indices = @transform_2, window_bounds = array<i64: 1, 4, 256>}, {transform_indices = @transform_3, window_bounds = array<i64: 1, 4, 256>}, {transform_indices = @transform_4, window_bounds = array<i64: 1, 1, 256>}, {transform_indices = @transform_5, window_bounds = array<i64: 1, 1, 256>}]} {
    %c0 = arith.constant 0 : index
    %c0_0 = arith.constant 0 : index
    %c0_1 = arith.constant 0 : index
    %0 = vector.load %arg4[%c0, %c0_0, %c0_1] : memref<1x4x256xf32, #tpu.memory_space<vmem>>, vector<1x4x256xf32>
    %c0_2 = arith.constant 0 : index
    %c0_3 = arith.constant 0 : index
    %c0_4 = arith.constant 0 : index
    %1 = vector.load %arg5[%c0_2, %c0_3, %c0_4] : memref<1x4x256xf32, #tpu.memory_space<vmem>>, vector<1x4x256xf32>
    %c0_i32 = arith.constant 0 : i32
    %2 = arith.cmpi eq, %arg1, %c0_i32 : i32
    %3 = arith.extui %2 : i1 to i32
    %c0_i32_5 = arith.constant 0 : i32
    %4 = arith.cmpi ne, %3, %c0_i32_5 : i32
    scf.if %4 {
      %cst_27 = arith.constant 0.000000e+00 : f32
      %24 = vector.broadcast %cst_27 : f32 to vector<1x256xf32>
      %c0_28 = arith.constant 0 : index
      %c0_29 = arith.constant 0 : index
      %25 = vector.load %arg8[%c0_28, %c0_29] : memref<1x256xf32, #tpu.memory_space<vmem>>, vector<1x256xf32>
      tpu.vector_store %arg8[%c0_28, %c0_29], %24 {strides = array<i32>} : memref<1x256xf32, #tpu.memory_space<vmem>>, vector<1x256xf32>,
      %cst_30 = arith.constant 0.000000e+00 : f32
      %26 = vector.broadcast %cst_30 : f32 to vector<1x256xf32>
      %c0_31 = arith.constant 0 : index
      %c0_32 = arith.constant 0 : index
      %27 = vector.load %arg9[%c0_31, %c0_32] : memref<1x256xf32, #tpu.memory_space<vmem>>, vector<1x256xf32>
      tpu.vector_store %arg9[%c0_31, %c0_32], %26 {strides = array<i32>} : memref<1x256xf32, #tpu.memory_space<vmem>>, vector<1x256xf32>,
      %cst_33 = arith.constant 0xFF800000 : f32
      %28 = vector.broadcast %cst_33 : f32 to vector<1x256xf32>
      %c0_34 = arith.constant 0 : index
      %c0_35 = arith.constant 0 : index
      %29 = vector.load %arg10[%c0_34, %c0_35] : memref<1x256xf32, #tpu.memory_space<vmem>>, vector<1x256xf32>
      tpu.vector_store %arg10[%c0_34, %c0_35], %28 {strides = array<i32>} : memref<1x256xf32, #tpu.memory_space<vmem>>, vector<1x256xf32>,
      %cst_36 = arith.constant 0xFF800000 : f32
      %30 = vector.broadcast %cst_36 : f32 to vector<1x256xf32>
      %c0_37 = arith.constant 0 : index
      %c0_38 = arith.constant 0 : index
      %31 = vector.load %arg11[%c0_37, %c0_38] : memref<1x256xf32, #tpu.memory_space<vmem>>, vector<1x256xf32>
      tpu.vector_store %arg11[%c0_37, %c0_38], %30 {strides = array<i32>} : memref<1x256xf32, #tpu.memory_space<vmem>>, vector<1x256xf32>,
    } else {
    }
    %c0_6 = arith.constant 0 : index
    %c0_7 = arith.constant 0 : index
    %5 = vector.load %arg8[%c0_6, %c0_7] : memref<1x256xf32, #tpu.memory_space<vmem>>, vector<1x256xf32>
    %cst = arith.constant dense<0.000000e+00> : vector<1x256xf32>
    %6 = vector.multi_reduction <add>, %0, %cst [1] : vector<1x4x256xf32> to vector<1x256xf32>
    %7 = arith.addf %5, %6 : vector<1x256xf32>
    %c0_8 = arith.constant 0 : index
    %c0_9 = arith.constant 0 : index
    %8 = vector.load %arg8[%c0_8, %c0_9] : memref<1x256xf32, #tpu.memory_space<vmem>>, vector<1x256xf32>
    tpu.vector_store %arg8[%c0_8, %c0_9], %7 {strides = array<i32>} : memref<1x256xf32, #tpu.memory_space<vmem>>, vector<1x256xf32>,
    %c0_10 = arith.constant 0 : index
    %c0_11 = arith.constant 0 : index
    %9 = vector.load %arg9[%c0_10, %c0_11] : memref<1x256xf32, #tpu.memory_space<vmem>>, vector<1x256xf32>
    %cst_12 = arith.constant dense<0.000000e+00> : vector<1x256xf32>
    %10 = vector.multi_reduction <add>, %1, %cst_12 [1] : vector<1x4x256xf32> to vector<1x256xf32>
    %11 = arith.addf %9, %10 : vector<1x256xf32>
    %c0_13 = arith.constant 0 : index
    %c0_14 = arith.constant 0 : index
    %12 = vector.load %arg9[%c0_13, %c0_14] : memref<1x256xf32, #tpu.memory_space<vmem>>, vector<1x256xf32>
    tpu.vector_store %arg9[%c0_13, %c0_14], %11 {strides = array<i32>} : memref<1x256xf32, #tpu.memory_space<vmem>>, vector<1x256xf32>,
    %c0_15 = arith.constant 0 : index
    %c0_16 = arith.constant 0 : index
    %13 = vector.load %arg10[%c0_15, %c0_16] : memref<1x256xf32, #tpu.memory_space<vmem>>, vector<1x256xf32>
    %cst_17 = arith.constant dense<0xFF800000> : vector<1x256xf32>
    %14 = vector.multi_reduction <maximumf>, %0, %cst_17 [1] : vector<1x4x256xf32> to vector<1x256xf32>
    %15 = arith.maximumf %13, %14 : vector<1x256xf32>
    %c0_18 = arith.constant 0 : index
    %c0_19 = arith.constant 0 : index
    %16 = vector.load %arg10[%c0_18, %c0_19] : memref<1x256xf32, #tpu.memory_space<vmem>>, vector<1x256xf32>
    tpu.vector_store %arg10[%c0_18, %c0_19], %15 {strides = array<i32>} : memref<1x256xf32, #tpu.memory_space<vmem>>, vector<1x256xf32>,
    %c0_20 = arith.constant 0 : index
    %c0_21 = arith.constant 0 : index
    %17 = vector.load %arg11[%c0_20, %c0_21] : memref<1x256xf32, #tpu.memory_space<vmem>>, vector<1x256xf32>
    %cst_22 = arith.constant dense<0xFF800000> : vector<1x256xf32>
    %18 = vector.multi_reduction <maximumf>, %1, %cst_22 [1] : vector<1x4x256xf32> to vector<1x256xf32>
    %19 = arith.maximumf %17, %18 : vector<1x256xf32>
    %c0_23 = arith.constant 0 : index
    %c0_24 = arith.constant 0 : index
    %20 = vector.load %arg11[%c0_23, %c0_24] : memref<1x256xf32, #tpu.memory_space<vmem>>, vector<1x256xf32>
    tpu.vector_store %arg11[%c0_23, %c0_24], %19 {strides = array<i32>} : memref<1x256xf32, #tpu.memory_space<vmem>>, vector<1x256xf32>,
    %c0_i32_25 = arith.constant 0 : i32
    %21 = arith.cmpi eq, %arg1, %c0_i32_25 : i32
    %22 = arith.extui %21 : i1 to i32
    %c0_i32_26 = arith.constant 0 : i32
    %23 = arith.cmpi ne, %22, %c0_i32_26 : i32
    scf.if %23 {
      %c0_27 = arith.constant 0 : index
      %c0_28 = arith.constant 0 : index
      %24 = vector.load %arg8[%c0_27, %c0_28] : memref<1x256xf32, #tpu.memory_space<vmem>>, vector<1x256xf32>
      %cst_29 = arith.constant 2.500000e-01 : f32
      %25 = vector.broadcast %cst_29 : f32 to vector<1x256xf32>
      %26 = arith.mulf %24, %25 : vector<1x256xf32>
      %c0_30 = arith.constant 0 : index
      %c0_31 = arith.constant 0 : index
      %27 = vector.load %arg9[%c0_30, %c0_31] : memref<1x256xf32, #tpu.memory_space<vmem>>, vector<1x256xf32>
      %cst_32 = arith.constant 2.500000e-01 : f32
      %28 = vector.broadcast %cst_32 : f32 to vector<1x256xf32>
      %29 = arith.mulf %27, %28 : vector<1x256xf32>
      %c0_33 = arith.constant 0 : index
      %c0_34 = arith.constant 0 : index
      %30 = vector.load %arg10[%c0_33, %c0_34] : memref<1x256xf32, #tpu.memory_space<vmem>>, vector<1x256xf32>
      %c0_35 = arith.constant 0 : index
      %c0_36 = arith.constant 0 : index
      %31 = vector.load %arg11[%c0_35, %c0_36] : memref<1x256xf32, #tpu.memory_space<vmem>>, vector<1x256xf32>
      %32 = tpu.iota {dimensions = array<i32: 1>} : vector<1x256xi32>
      %c16_i32 = arith.constant 16 : i32
      %c0_i32_37 = arith.constant 0 : i32
      %33 = arith.cmpi eq, %c16_i32, %c0_i32_37 : i32
      %c1_i32 = arith.constant 1 : i32
      %34 = arith.select %33, %c1_i32, %c16_i32 : i32
      %35 = vector.broadcast %34 : i32 to vector<1x256xi32>
      %36 = arith.remsi %32, %35 : vector<1x256xi32>
      %c0_i32_38 = arith.constant 0 : i32
      %37 = vector.broadcast %c0_i32_38 : i32 to vector<1x256xi32>
      %38 = arith.cmpi ne, %36, %37 : vector<1x256xi32>
      %c0_i32_39 = arith.constant 0 : i32
      %39 = vector.broadcast %c0_i32_39 : i32 to vector<1x256xi32>
      %40 = arith.cmpi slt, %36, %39 : vector<1x256xi32>
      %c0_i32_40 = arith.constant 0 : i32
      %41 = arith.cmpi slt, %34, %c0_i32_40 : i32
      %42 = vector.broadcast %41 : i1 to vector<1x256xi1>
      %43 = vector.broadcast %42 : vector<1x256xi1> to vector<1x256xi1>
      %44 = arith.xori %40, %43 : vector<1x256xi1>
      %45 = arith.andi %44, %38 : vector<1x256xi1>
      %46 = vector.broadcast %34 : i32 to vector<1x256xi32>
      %47 = arith.addi %36, %46 : vector<1x256xi32>
      %48 = arith.select %45, %47, %36 : vector<1x256xi1>, vector<1x256xi32>
      %cst_41 = arith.constant 0.000000e+00 : f32
      %49 = vector.broadcast %cst_41 : f32 to vector<1x256xf32>
      %cst_42 = arith.constant 0.000000e+00 : f32
      %50 = vector.broadcast %cst_42 : f32 to vector<1x256xf32>
      %c16_i32_43 = arith.constant 16 : i32
      %51 = vector.broadcast %c16_i32_43 : i32 to vector<1x256xi32>
      %52 = arith.cmpi sge, %32, %51 : vector<1x256xi32>
      %c1_i32_44 = arith.constant 1 : i32
      %53 = vector.broadcast %c1_i32_44 : i32 to vector<1x256xi32>
      %54 = arith.cmpi sge, %48, %53 : vector<1x256xi32>
      %55 = arith.andi %52, %54 : vector<1x256xi1>
      %c0_45 = arith.constant 0 : index
      %56 = memref.load %arg2[%c0_45] : memref<18xf32, #tpu.memory_space<smem>>
      %c0_46 = arith.constant 0 : index
      %57 = memref.load %arg3[%c0_46] : memref<18xf32, #tpu.memory_space<smem>>
      %c17_i32 = arith.constant 17 : i32
      %58 = tpu.dynamic_rotate %26 by %c17_i32 dim 1 : vector<1x256xf32>, i32 -> vector<1x256xf32>
      %cst_47 = arith.constant 0.000000e+00 : f32
      %59 = vector.broadcast %cst_47 : f32 to vector<1x256xf32>
      %60 = arith.select %55, %58, %59 : vector<1x256xi1>, vector<1x256xf32>
      %c17_i32_48 = arith.constant 17 : i32
      %61 = tpu.dynamic_rotate %29 by %c17_i32_48 dim 1 : vector<1x256xf32>, i32 -> vector<1x256xf32>
      %cst_49 = arith.constant 0.000000e+00 : f32
      %62 = vector.broadcast %cst_49 : f32 to vector<1x256xf32>
      %63 = arith.select %55, %61, %62 : vector<1x256xi1>, vector<1x256xf32>
      %64 = vector.broadcast %56 : f32 to vector<1x256xf32>
      %65 = arith.mulf %64, %60 : vector<1x256xf32>
      %66 = arith.addf %49, %65 : vector<1x256xf32>
      %67 = vector.broadcast %57 : f32 to vector<1x256xf32>
      %68 = arith.mulf %67, %63 : vector<1x256xf32>
      %69 = arith.subf %66, %68 : vector<1x256xf32>
      %70 = vector.broadcast %56 : f32 to vector<1x256xf32>
      %71 = arith.mulf %70, %63 : vector<1x256xf32>
      %72 = arith.addf %50, %71 : vector<1x256xf32>
      %73 = vector.broadcast %57 : f32 to vector<1x256xf32>
      %74 = arith.mulf %73, %60 : vector<1x256xf32>
      %75 = arith.addf %72, %74 : vector<1x256xf32>
      %c9 = arith.constant 9 : index
      %76 = memref.load %arg2[%c9] : memref<18xf32, #tpu.memory_space<smem>>
      %c9_50 = arith.constant 9 : index
      %77 = memref.load %arg3[%c9_50] : memref<18xf32, #tpu.memory_space<smem>>
      %c17_i32_51 = arith.constant 17 : i32
      %78 = tpu.dynamic_rotate %30 by %c17_i32_51 dim 1 : vector<1x256xf32>, i32 -> vector<1x256xf32>
      %cst_52 = arith.constant 0.000000e+00 : f32
      %79 = vector.broadcast %cst_52 : f32 to vector<1x256xf32>
      %80 = arith.select %55, %78, %79 : vector<1x256xi1>, vector<1x256xf32>
      %c17_i32_53 = arith.constant 17 : i32
      %81 = tpu.dynamic_rotate %31 by %c17_i32_53 dim 1 : vector<1x256xf32>, i32 -> vector<1x256xf32>
      %cst_54 = arith.constant 0.000000e+00 : f32
      %82 = vector.broadcast %cst_54 : f32 to vector<1x256xf32>
      %83 = arith.select %55, %81, %82 : vector<1x256xi1>, vector<1x256xf32>
      %84 = vector.broadcast %76 : f32 to vector<1x256xf32>
      %85 = arith.mulf %84, %80 : vector<1x256xf32>
      %86 = arith.addf %69, %85 : vector<1x256xf32>
      %87 = vector.broadcast %77 : f32 to vector<1x256xf32>
      %88 = arith.mulf %87, %83 : vector<1x256xf32>
      %89 = arith.subf %86, %88 : vector<1x256xf32>
      %90 = vector.broadcast %76 : f32 to vector<1x256xf32>
      %91 = arith.mulf %90, %83 : vector<1x256xf32>
      %92 = arith.addf %75, %91 : vector<1x256xf32>
      %93 = vector.broadcast %77 : f32 to vector<1x256xf32>
      %94 = arith.mulf %93, %80 : vector<1x256xf32>
      %95 = arith.addf %92, %94 : vector<1x256xf32>
      %c1 = arith.constant 1 : index
      %96 = memref.load %arg2[%c1] : memref<18xf32, #tpu.memory_space<smem>>
      %c1_55 = arith.constant 1 : index
      %97 = memref.load %arg3[%c1_55] : memref<18xf32, #tpu.memory_space<smem>>
      %c16_i32_56 = arith.constant 16 : i32
      %98 = tpu.dynamic_rotate %26 by %c16_i32_56 dim 1 : vector<1x256xf32>, i32 -> vector<1x256xf32>
      %cst_57 = arith.constant 0.000000e+00 : f32
      %99 = vector.broadcast %cst_57 : f32 to vector<1x256xf32>
      %100 = arith.select %52, %98, %99 : vector<1x256xi1>, vector<1x256xf32>
      %c16_i32_58 = arith.constant 16 : i32
      %101 = tpu.dynamic_rotate %29 by %c16_i32_58 dim 1 : vector<1x256xf32>, i32 -> vector<1x256xf32>
      %cst_59 = arith.constant 0.000000e+00 : f32
      %102 = vector.broadcast %cst_59 : f32 to vector<1x256xf32>
      %103 = arith.select %52, %101, %102 : vector<1x256xi1>, vector<1x256xf32>
      %104 = vector.broadcast %96 : f32 to vector<1x256xf32>
      %105 = arith.mulf %104, %100 : vector<1x256xf32>
      %106 = arith.addf %89, %105 : vector<1x256xf32>
      %107 = vector.broadcast %97 : f32 to vector<1x256xf32>
      %108 = arith.mulf %107, %103 : vector<1x256xf32>
      %109 = arith.subf %106, %108 : vector<1x256xf32>
      %110 = vector.broadcast %96 : f32 to vector<1x256xf32>
      %111 = arith.mulf %110, %103 : vector<1x256xf32>
      %112 = arith.addf %95, %111 : vector<1x256xf32>
      %113 = vector.broadcast %97 : f32 to vector<1x256xf32>
      %114 = arith.mulf %113, %100 : vector<1x256xf32>
      %115 = arith.addf %112, %114 : vector<1x256xf32>
      %c10 = arith.constant 10 : index
      %116 = memref.load %arg2[%c10] : memref<18xf32, #tpu.memory_space<smem>>
      %c10_60 = arith.constant 10 : index
      %117 = memref.load %arg3[%c10_60] : memref<18xf32, #tpu.memory_space<smem>>
      %c16_i32_61 = arith.constant 16 : i32
      %118 = tpu.dynamic_rotate %30 by %c16_i32_61 dim 1 : vector<1x256xf32>, i32 -> vector<1x256xf32>
      %cst_62 = arith.constant 0.000000e+00 : f32
      %119 = vector.broadcast %cst_62 : f32 to vector<1x256xf32>
      %120 = arith.select %52, %118, %119 : vector<1x256xi1>, vector<1x256xf32>
      %c16_i32_63 = arith.constant 16 : i32
      %121 = tpu.dynamic_rotate %31 by %c16_i32_63 dim 1 : vector<1x256xf32>, i32 -> vector<1x256xf32>
      %cst_64 = arith.constant 0.000000e+00 : f32
      %122 = vector.broadcast %cst_64 : f32 to vector<1x256xf32>
      %123 = arith.select %52, %121, %122 : vector<1x256xi1>, vector<1x256xf32>
      %124 = vector.broadcast %116 : f32 to vector<1x256xf32>
      %125 = arith.mulf %124, %120 : vector<1x256xf32>
      %126 = arith.addf %109, %125 : vector<1x256xf32>
      %127 = vector.broadcast %117 : f32 to vector<1x256xf32>
      %128 = arith.mulf %127, %123 : vector<1x256xf32>
      %129 = arith.subf %126, %128 : vector<1x256xf32>
      %130 = vector.broadcast %116 : f32 to vector<1x256xf32>
      %131 = arith.mulf %130, %123 : vector<1x256xf32>
      %132 = arith.addf %115, %131 : vector<1x256xf32>
      %133 = vector.broadcast %117 : f32 to vector<1x256xf32>
      %134 = arith.mulf %133, %120 : vector<1x256xf32>
      %135 = arith.addf %132, %134 : vector<1x256xf32>
      %c15_i32 = arith.constant 15 : i32
      %136 = vector.broadcast %c15_i32 : i32 to vector<1x256xi32>
      %137 = arith.cmpi slt, %48, %136 : vector<1x256xi32>
      %138 = arith.andi %52, %137 : vector<1x256xi1>
      %c2 = arith.constant 2 : index
      %139 = memref.load %arg2[%c2] : memref<18xf32, #tpu.memory_space<smem>>
      %c2_65 = arith.constant 2 : index
      %140 = memref.load %arg3[%c2_65] : memref<18xf32, #tpu.memory_space<smem>>
      %c15_i32_66 = arith.constant 15 : i32
      %141 = tpu.dynamic_rotate %26 by %c15_i32_66 dim 1 : vector<1x256xf32>, i32 -> vector<1x256xf32>
      %cst_67 = arith.constant 0.000000e+00 : f32
      %142 = vector.broadcast %cst_67 : f32 to vector<1x256xf32>
      %143 = arith.select %138, %141, %142 : vector<1x256xi1>, vector<1x256xf32>
      %c15_i32_68 = arith.constant 15 : i32
      %144 = tpu.dynamic_rotate %29 by %c15_i32_68 dim 1 : vector<1x256xf32>, i32 -> vector<1x256xf32>
      %cst_69 = arith.constant 0.000000e+00 : f32
      %145 = vector.broadcast %cst_69 : f32 to vector<1x256xf32>
      %146 = arith.select %138, %144, %145 : vector<1x256xi1>, vector<1x256xf32>
      %147 = vector.broadcast %139 : f32 to vector<1x256xf32>
      %148 = arith.mulf %147, %143 : vector<1x256xf32>
      %149 = arith.addf %129, %148 : vector<1x256xf32>
      %150 = vector.broadcast %140 : f32 to vector<1x256xf32>
      %151 = arith.mulf %150, %146 : vector<1x256xf32>
      %152 = arith.subf %149, %151 : vector<1x256xf32>
      %153 = vector.broadcast %139 : f32 to vector<1x256xf32>
      %154 = arith.mulf %153, %146 : vector<1x256xf32>
      %155 = arith.addf %135, %154 : vector<1x256xf32>
      %156 = vector.broadcast %140 : f32 to vector<1x256xf32>
      %157 = arith.mulf %156, %143 : vector<1x256xf32>
      %158 = arith.addf %155, %157 : vector<1x256xf32>
      %c11 = arith.constant 11 : index
      %159 = memref.load %arg2[%c11] : memref<18xf32, #tpu.memory_space<smem>>
      %c11_70 = arith.constant 11 : index
      %160 = memref.load %arg3[%c11_70] : memref<18xf32, #tpu.memory_space<smem>>
      %c15_i32_71 = arith.constant 15 : i32
      %161 = tpu.dynamic_rotate %30 by %c15_i32_71 dim 1 : vector<1x256xf32>, i32 -> vector<1x256xf32>
      %cst_72 = arith.constant 0.000000e+00 : f32
      %162 = vector.broadcast %cst_72 : f32 to vector<1x256xf32>
      %163 = arith.select %138, %161, %162 : vector<1x256xi1>, vector<1x256xf32>
      %c15_i32_73 = arith.constant 15 : i32
      %164 = tpu.dynamic_rotate %31 by %c15_i32_73 dim 1 : vector<1x256xf32>, i32 -> vector<1x256xf32>
      %cst_74 = arith.constant 0.000000e+00 : f32
      %165 = vector.broadcast %cst_74 : f32 to vector<1x256xf32>
      %166 = arith.select %138, %164, %165 : vector<1x256xi1>, vector<1x256xf32>
      %167 = vector.broadcast %159 : f32 to vector<1x256xf32>
      %168 = arith.mulf %167, %163 : vector<1x256xf32>
      %169 = arith.addf %152, %168 : vector<1x256xf32>
      %170 = vector.broadcast %160 : f32 to vector<1x256xf32>
      %171 = arith.mulf %170, %166 : vector<1x256xf32>
      %172 = arith.subf %169, %171 : vector<1x256xf32>
      %173 = vector.broadcast %159 : f32 to vector<1x256xf32>
      %174 = arith.mulf %173, %166 : vector<1x256xf32>
      %175 = arith.addf %158, %174 : vector<1x256xf32>
      %176 = vector.broadcast %160 : f32 to vector<1x256xf32>
      %177 = arith.mulf %176, %163 : vector<1x256xf32>
      %178 = arith.addf %175, %177 : vector<1x256xf32>
      %c1_i32_75 = arith.constant 1 : i32
      %179 = vector.broadcast %c1_i32_75 : i32 to vector<1x256xi32>
      %180 = arith.cmpi sge, %48, %179 : vector<1x256xi32>
      %c3 = arith.constant 3 : index
      %181 = memref.load %arg2[%c3] : memref<18xf32, #tpu.memory_space<smem>>
      %c3_76 = arith.constant 3 : index
      %182 = memref.load %arg3[%c3_76] : memref<18xf32, #tpu.memory_space<smem>>
      %c1_i32_77 = arith.constant 1 : i32
      %183 = tpu.dynamic_rotate %26 by %c1_i32_77 dim 1 : vector<1x256xf32>, i32 -> vector<1x256xf32>
      %cst_78 = arith.constant 0.000000e+00 : f32
      %184 = vector.broadcast %cst_78 : f32 to vector<1x256xf32>
      %185 = arith.select %180, %183, %184 : vector<1x256xi1>, vector<1x256xf32>
      %c1_i32_79 = arith.constant 1 : i32
      %186 = tpu.dynamic_rotate %29 by %c1_i32_79 dim 1 : vector<1x256xf32>, i32 -> vector<1x256xf32>
      %cst_80 = arith.constant 0.000000e+00 : f32
      %187 = vector.broadcast %cst_80 : f32 to vector<1x256xf32>
      %188 = arith.select %180, %186, %187 : vector<1x256xi1>, vector<1x256xf32>
      %189 = vector.broadcast %181 : f32 to vector<1x256xf32>
      %190 = arith.mulf %189, %185 : vector<1x256xf32>
      %191 = arith.addf %172, %190 : vector<1x256xf32>
      %192 = vector.broadcast %182 : f32 to vector<1x256xf32>
      %193 = arith.mulf %192, %188 : vector<1x256xf32>
      %194 = arith.subf %191, %193 : vector<1x256xf32>
      %195 = vector.broadcast %181 : f32 to vector<1x256xf32>
      %196 = arith.mulf %195, %188 : vector<1x256xf32>
      %197 = arith.addf %178, %196 : vector<1x256xf32>
      %198 = vector.broadcast %182 : f32 to vector<1x256xf32>
      %199 = arith.mulf %198, %185 : vector<1x256xf32>
      %200 = arith.addf %197, %199 : vector<1x256xf32>
      %c12 = arith.constant 12 : index
      %201 = memref.load %arg2[%c12] : memref<18xf32, #tpu.memory_space<smem>>
      %c12_81 = arith.constant 12 : index
      %202 = memref.load %arg3[%c12_81] : memref<18xf32, #tpu.memory_space<smem>>
      %c1_i32_82 = arith.constant 1 : i32
      %203 = tpu.dynamic_rotate %30 by %c1_i32_82 dim 1 : vector<1x256xf32>, i32 -> vector<1x256xf32>
      %cst_83 = arith.constant 0.000000e+00 : f32
      %204 = vector.broadcast %cst_83 : f32 to vector<1x256xf32>
      %205 = arith.select %180, %203, %204 : vector<1x256xi1>, vector<1x256xf32>
      %c1_i32_84 = arith.constant 1 : i32
      %206 = tpu.dynamic_rotate %31 by %c1_i32_84 dim 1 : vector<1x256xf32>, i32 -> vector<1x256xf32>
      %cst_85 = arith.constant 0.000000e+00 : f32
      %207 = vector.broadcast %cst_85 : f32 to vector<1x256xf32>
      %208 = arith.select %180, %206, %207 : vector<1x256xi1>, vector<1x256xf32>
      %209 = vector.broadcast %201 : f32 to vector<1x256xf32>
      %210 = arith.mulf %209, %205 : vector<1x256xf32>
      %211 = arith.addf %194, %210 : vector<1x256xf32>
      %212 = vector.broadcast %202 : f32 to vector<1x256xf32>
      %213 = arith.mulf %212, %208 : vector<1x256xf32>
      %214 = arith.subf %211, %213 : vector<1x256xf32>
      %215 = vector.broadcast %201 : f32 to vector<1x256xf32>
      %216 = arith.mulf %215, %208 : vector<1x256xf32>
      %217 = arith.addf %200, %216 : vector<1x256xf32>
      %218 = vector.broadcast %202 : f32 to vector<1x256xf32>
      %219 = arith.mulf %218, %205 : vector<1x256xf32>
      %220 = arith.addf %217, %219 : vector<1x256xf32>
      %c4 = arith.constant 4 : index
      %221 = memref.load %arg2[%c4] : memref<18xf32, #tpu.memory_space<smem>>
      %c4_86 = arith.constant 4 : index
      %222 = memref.load %arg3[%c4_86] : memref<18xf32, #tpu.memory_space<smem>>
      %223 = vector.broadcast %221 : f32 to vector<1x256xf32>
      %224 = arith.mulf %223, %26 : vector<1x256xf32>
      %225 = arith.addf %214, %224 : vector<1x256xf32>
      %226 = vector.broadcast %222 : f32 to vector<1x256xf32>
      %227 = arith.mulf %226, %29 : vector<1x256xf32>
      %228 = arith.subf %225, %227 : vector<1x256xf32>
      %229 = vector.broadcast %221 : f32 to vector<1x256xf32>
      %230 = arith.mulf %229, %29 : vector<1x256xf32>
      %231 = arith.addf %220, %230 : vector<1x256xf32>
      %232 = vector.broadcast %222 : f32 to vector<1x256xf32>
      %233 = arith.mulf %232, %26 : vector<1x256xf32>
      %234 = arith.addf %231, %233 : vector<1x256xf32>
      %c13 = arith.constant 13 : index
      %235 = memref.load %arg2[%c13] : memref<18xf32, #tpu.memory_space<smem>>
      %c13_87 = arith.constant 13 : index
      %236 = memref.load %arg3[%c13_87] : memref<18xf32, #tpu.memory_space<smem>>
      %237 = vector.broadcast %235 : f32 to vector<1x256xf32>
      %238 = arith.mulf %237, %30 : vector<1x256xf32>
      %239 = arith.addf %228, %238 : vector<1x256xf32>
      %240 = vector.broadcast %236 : f32 to vector<1x256xf32>
      %241 = arith.mulf %240, %31 : vector<1x256xf32>
      %242 = arith.subf %239, %241 : vector<1x256xf32>
      %243 = vector.broadcast %235 : f32 to vector<1x256xf32>
      %244 = arith.mulf %243, %31 : vector<1x256xf32>
      %245 = arith.addf %234, %244 : vector<1x256xf32>
      %246 = vector.broadcast %236 : f32 to vector<1x256xf32>
      %247 = arith.mulf %246, %30 : vector<1x256xf32>
      %248 = arith.addf %245, %247 : vector<1x256xf32>
      %c15_i32_88 = arith.constant 15 : i32
      %249 = vector.broadcast %c15_i32_88 : i32 to vector<1x256xi32>
      %250 = arith.cmpi slt, %48, %249 : vector<1x256xi32>
      %c5 = arith.constant 5 : index
      %251 = memref.load %arg2[%c5] : memref<18xf32, #tpu.memory_space<smem>>
      %c5_89 = arith.constant 5 : index
      %252 = memref.load %arg3[%c5_89] : memref<18xf32, #tpu.memory_space<smem>>
      %c255_i32 = arith.constant 255 : i32
      %253 = tpu.dynamic_rotate %26 by %c255_i32 dim 1 : vector<1x256xf32>, i32 -> vector<1x256xf32>
      %cst_90 = arith.constant 0.000000e+00 : f32
      %254 = vector.broadcast %cst_90 : f32 to vector<1x256xf32>
      %255 = arith.select %250, %253, %254 : vector<1x256xi1>, vector<1x256xf32>
      %c255_i32_91 = arith.constant 255 : i32
      %256 = tpu.dynamic_rotate %29 by %c255_i32_91 dim 1 : vector<1x256xf32>, i32 -> vector<1x256xf32>
      %cst_92 = arith.constant 0.000000e+00 : f32
      %257 = vector.broadcast %cst_92 : f32 to vector<1x256xf32>
      %258 = arith.select %250, %256, %257 : vector<1x256xi1>, vector<1x256xf32>
      %259 = vector.broadcast %251 : f32 to vector<1x256xf32>
      %260 = arith.mulf %259, %255 : vector<1x256xf32>
      %261 = arith.addf %242, %260 : vector<1x256xf32>
      %262 = vector.broadcast %252 : f32 to vector<1x256xf32>
      %263 = arith.mulf %262, %258 : vector<1x256xf32>
      %264 = arith.subf %261, %263 : vector<1x256xf32>
      %265 = vector.broadcast %251 : f32 to vector<1x256xf32>
      %266 = arith.mulf %265, %258 : vector<1x256xf32>
      %267 = arith.addf %248, %266 : vector<1x256xf32>
      %268 = vector.broadcast %252 : f32 to vector<1x256xf32>
      %269 = arith.mulf %268, %255 : vector<1x256xf32>
      %270 = arith.addf %267, %269 : vector<1x256xf32>
      %c14 = arith.constant 14 : index
      %271 = memref.load %arg2[%c14] : memref<18xf32, #tpu.memory_space<smem>>
      %c14_93 = arith.constant 14 : index
      %272 = memref.load %arg3[%c14_93] : memref<18xf32, #tpu.memory_space<smem>>
      %c255_i32_94 = arith.constant 255 : i32
      %273 = tpu.dynamic_rotate %30 by %c255_i32_94 dim 1 : vector<1x256xf32>, i32 -> vector<1x256xf32>
      %cst_95 = arith.constant 0.000000e+00 : f32
      %274 = vector.broadcast %cst_95 : f32 to vector<1x256xf32>
      %275 = arith.select %250, %273, %274 : vector<1x256xi1>, vector<1x256xf32>
      %c255_i32_96 = arith.constant 255 : i32
      %276 = tpu.dynamic_rotate %31 by %c255_i32_96 dim 1 : vector<1x256xf32>, i32 -> vector<1x256xf32>
      %cst_97 = arith.constant 0.000000e+00 : f32
      %277 = vector.broadcast %cst_97 : f32 to vector<1x256xf32>
      %278 = arith.select %250, %276, %277 : vector<1x256xi1>, vector<1x256xf32>
      %279 = vector.broadcast %271 : f32 to vector<1x256xf32>
      %280 = arith.mulf %279, %275 : vector<1x256xf32>
      %281 = arith.addf %264, %280 : vector<1x256xf32>
      %282 = vector.broadcast %272 : f32 to vector<1x256xf32>
      %283 = arith.mulf %282, %278 : vector<1x256xf32>
      %284 = arith.subf %281, %283 : vector<1x256xf32>
      %285 = vector.broadcast %271 : f32 to vector<1x256xf32>
      %286 = arith.mulf %285, %278 : vector<1x256xf32>
      %287 = arith.addf %270, %286 : vector<1x256xf32>
      %288 = vector.broadcast %272 : f32 to vector<1x256xf32>
      %289 = arith.mulf %288, %275 : vector<1x256xf32>
      %290 = arith.addf %287, %289 : vector<1x256xf32>
      %c240_i32 = arith.constant 240 : i32
      %291 = vector.broadcast %c240_i32 : i32 to vector<1x256xi32>
      %292 = arith.cmpi slt, %32, %291 : vector<1x256xi32>
      %c1_i32_98 = arith.constant 1 : i32
      %293 = vector.broadcast %c1_i32_98 : i32 to vector<1x256xi32>
      %294 = arith.cmpi sge, %48, %293 : vector<1x256xi32>
      %295 = arith.andi %292, %294 : vector<1x256xi1>
      %c6 = arith.constant 6 : index
      %296 = memref.load %arg2[%c6] : memref<18xf32, #tpu.memory_space<smem>>
      %c6_99 = arith.constant 6 : index
      %297 = memref.load %arg3[%c6_99] : memref<18xf32, #tpu.memory_space<smem>>
      %c241_i32 = arith.constant 241 : i32
      %298 = tpu.dynamic_rotate %26 by %c241_i32 dim 1 : vector<1x256xf32>, i32 -> vector<1x256xf32>
      %cst_100 = arith.constant 0.000000e+00 : f32
      %299 = vector.broadcast %cst_100 : f32 to vector<1x256xf32>
      %300 = arith.select %295, %298, %299 : vector<1x256xi1>, vector<1x256xf32>
      %c241_i32_101 = arith.constant 241 : i32
      %301 = tpu.dynamic_rotate %29 by %c241_i32_101 dim 1 : vector<1x256xf32>, i32 -> vector<1x256xf32>
      %cst_102 = arith.constant 0.000000e+00 : f32
      %302 = vector.broadcast %cst_102 : f32 to vector<1x256xf32>
      %303 = arith.select %295, %301, %302 : vector<1x256xi1>, vector<1x256xf32>
      %304 = vector.broadcast %296 : f32 to vector<1x256xf32>
      %305 = arith.mulf %304, %300 : vector<1x256xf32>
      %306 = arith.addf %284, %305 : vector<1x256xf32>
      %307 = vector.broadcast %297 : f32 to vector<1x256xf32>
      %308 = arith.mulf %307, %303 : vector<1x256xf32>
      %309 = arith.subf %306, %308 : vector<1x256xf32>
      %310 = vector.broadcast %296 : f32 to vector<1x256xf32>
      %311 = arith.mulf %310, %303 : vector<1x256xf32>
      %312 = arith.addf %290, %311 : vector<1x256xf32>
      %313 = vector.broadcast %297 : f32 to vector<1x256xf32>
      %314 = arith.mulf %313, %300 : vector<1x256xf32>
      %315 = arith.addf %312, %314 : vector<1x256xf32>
      %c15 = arith.constant 15 : index
      %316 = memref.load %arg2[%c15] : memref<18xf32, #tpu.memory_space<smem>>
      %c15_103 = arith.constant 15 : index
      %317 = memref.load %arg3[%c15_103] : memref<18xf32, #tpu.memory_space<smem>>
      %c241_i32_104 = arith.constant 241 : i32
      %318 = tpu.dynamic_rotate %30 by %c241_i32_104 dim 1 : vector<1x256xf32>, i32 -> vector<1x256xf32>
      %cst_105 = arith.constant 0.000000e+00 : f32
      %319 = vector.broadcast %cst_105 : f32 to vector<1x256xf32>
      %320 = arith.select %295, %318, %319 : vector<1x256xi1>, vector<1x256xf32>
      %c241_i32_106 = arith.constant 241 : i32
      %321 = tpu.dynamic_rotate %31 by %c241_i32_106 dim 1 : vector<1x256xf32>, i32 -> vector<1x256xf32>
      %cst_107 = arith.constant 0.000000e+00 : f32
      %322 = vector.broadcast %cst_107 : f32 to vector<1x256xf32>
      %323 = arith.select %295, %321, %322 : vector<1x256xi1>, vector<1x256xf32>
      %324 = vector.broadcast %316 : f32 to vector<1x256xf32>
      %325 = arith.mulf %324, %320 : vector<1x256xf32>
      %326 = arith.addf %309, %325 : vector<1x256xf32>
      %327 = vector.broadcast %317 : f32 to vector<1x256xf32>
      %328 = arith.mulf %327, %323 : vector<1x256xf32>
      %329 = arith.subf %326, %328 : vector<1x256xf32>
      %330 = vector.broadcast %316 : f32 to vector<1x256xf32>
      %331 = arith.mulf %330, %323 : vector<1x256xf32>
      %332 = arith.addf %315, %331 : vector<1x256xf32>
      %333 = vector.broadcast %317 : f32 to vector<1x256xf32>
      %334 = arith.mulf %333, %320 : vector<1x256xf32>
      %335 = arith.addf %332, %334 : vector<1x256xf32>
      %c7 = arith.constant 7 : index
      %336 = memref.load %arg2[%c7] : memref<18xf32, #tpu.memory_space<smem>>
      %c7_108 = arith.constant 7 : index
      %337 = memref.load %arg3[%c7_108] : memref<18xf32, #tpu.memory_space<smem>>
      %c240_i32_109 = arith.constant 240 : i32
      %338 = tpu.dynamic_rotate %26 by %c240_i32_109 dim 1 : vector<1x256xf32>, i32 -> vector<1x256xf32>
      %cst_110 = arith.constant 0.000000e+00 : f32
      %339 = vector.broadcast %cst_110 : f32 to vector<1x256xf32>
      %340 = arith.select %292, %338, %339 : vector<1x256xi1>, vector<1x256xf32>
      %c240_i32_111 = arith.constant 240 : i32
      %341 = tpu.dynamic_rotate %29 by %c240_i32_111 dim 1 : vector<1x256xf32>, i32 -> vector<1x256xf32>
      %cst_112 = arith.constant 0.000000e+00 : f32
      %342 = vector.broadcast %cst_112 : f32 to vector<1x256xf32>
      %343 = arith.select %292, %341, %342 : vector<1x256xi1>, vector<1x256xf32>
      %344 = vector.broadcast %336 : f32 to vector<1x256xf32>
      %345 = arith.mulf %344, %340 : vector<1x256xf32>
      %346 = arith.addf %329, %345 : vector<1x256xf32>
      %347 = vector.broadcast %337 : f32 to vector<1x256xf32>
      %348 = arith.mulf %347, %343 : vector<1x256xf32>
      %349 = arith.subf %346, %348 : vector<1x256xf32>
      %350 = vector.broadcast %336 : f32 to vector<1x256xf32>
      %351 = arith.mulf %350, %343 : vector<1x256xf32>
      %352 = arith.addf %335, %351 : vector<1x256xf32>
      %353 = vector.broadcast %337 : f32 to vector<1x256xf32>
      %354 = arith.mulf %353, %340 : vector<1x256xf32>
      %355 = arith.addf %352, %354 : vector<1x256xf32>
      %c16 = arith.constant 16 : index
      %356 = memref.load %arg2[%c16] : memref<18xf32, #tpu.memory_space<smem>>
      %c16_113 = arith.constant 16 : index
      %357 = memref.load %arg3[%c16_113] : memref<18xf32, #tpu.memory_space<smem>>
      %c240_i32_114 = arith.constant 240 : i32
      %358 = tpu.dynamic_rotate %30 by %c240_i32_114 dim 1 : vector<1x256xf32>, i32 -> vector<1x256xf32>
      %cst_115 = arith.constant 0.000000e+00 : f32
      %359 = vector.broadcast %cst_115 : f32 to vector<1x256xf32>
      %360 = arith.select %292, %358, %359 : vector<1x256xi1>, vector<1x256xf32>
      %c240_i32_116 = arith.constant 240 : i32
      %361 = tpu.dynamic_rotate %31 by %c240_i32_116 dim 1 : vector<1x256xf32>, i32 -> vector<1x256xf32>
      %cst_117 = arith.constant 0.000000e+00 : f32
      %362 = vector.broadcast %cst_117 : f32 to vector<1x256xf32>
      %363 = arith.select %292, %361, %362 : vector<1x256xi1>, vector<1x256xf32>
      %364 = vector.broadcast %356 : f32 to vector<1x256xf32>
      %365 = arith.mulf %364, %360 : vector<1x256xf32>
      %366 = arith.addf %349, %365 : vector<1x256xf32>
      %367 = vector.broadcast %357 : f32 to vector<1x256xf32>
      %368 = arith.mulf %367, %363 : vector<1x256xf32>
      %369 = arith.subf %366, %368 : vector<1x256xf32>
      %370 = vector.broadcast %356 : f32 to vector<1x256xf32>
      %371 = arith.mulf %370, %363 : vector<1x256xf32>
      %372 = arith.addf %355, %371 : vector<1x256xf32>
      %373 = vector.broadcast %357 : f32 to vector<1x256xf32>
      %374 = arith.mulf %373, %360 : vector<1x256xf32>
      %375 = arith.addf %372, %374 : vector<1x256xf32>
      %c15_i32_118 = arith.constant 15 : i32
      %376 = vector.broadcast %c15_i32_118 : i32 to vector<1x256xi32>
      %377 = arith.cmpi slt, %48, %376 : vector<1x256xi32>
      %378 = arith.andi %292, %377 : vector<1x256xi1>
      %c8 = arith.constant 8 : index
      %379 = memref.load %arg2[%c8] : memref<18xf32, #tpu.memory_space<smem>>
      %c8_119 = arith.constant 8 : index
      %380 = memref.load %arg3[%c8_119] : memref<18xf32, #tpu.memory_space<smem>>
      %c239_i32 = arith.constant 239 : i32
      %381 = tpu.dynamic_rotate %26 by %c239_i32 dim 1 : vector<1x256xf32>, i32 -> vector<1x256xf32>
      %cst_120 = arith.constant 0.000000e+00 : f32
      %382 = vector.broadcast %cst_120 : f32 to vector<1x256xf32>
      %383 = arith.select %378, %381, %382 : vector<1x256xi1>, vector<1x256xf32>
      %c239_i32_121 = arith.constant 239 : i32
      %384 = tpu.dynamic_rotate %29 by %c239_i32_121 dim 1 : vector<1x256xf32>, i32 -> vector<1x256xf32>
      %cst_122 = arith.constant 0.000000e+00 : f32
      %385 = vector.broadcast %cst_122 : f32 to vector<1x256xf32>
      %386 = arith.select %378, %384, %385 : vector<1x256xi1>, vector<1x256xf32>
      %387 = vector.broadcast %379 : f32 to vector<1x256xf32>
      %388 = arith.mulf %387, %383 : vector<1x256xf32>
      %389 = arith.addf %369, %388 : vector<1x256xf32>
      %390 = vector.broadcast %380 : f32 to vector<1x256xf32>
      %391 = arith.mulf %390, %386 : vector<1x256xf32>
      %392 = arith.subf %389, %391 : vector<1x256xf32>
      %393 = vector.broadcast %379 : f32 to vector<1x256xf32>
      %394 = arith.mulf %393, %386 : vector<1x256xf32>
      %395 = arith.addf %375, %394 : vector<1x256xf32>
      %396 = vector.broadcast %380 : f32 to vector<1x256xf32>
      %397 = arith.mulf %396, %383 : vector<1x256xf32>
      %398 = arith.addf %395, %397 : vector<1x256xf32>
      %c17 = arith.constant 17 : index
      %399 = memref.load %arg2[%c17] : memref<18xf32, #tpu.memory_space<smem>>
      %c17_123 = arith.constant 17 : index
      %400 = memref.load %arg3[%c17_123] : memref<18xf32, #tpu.memory_space<smem>>
      %c239_i32_124 = arith.constant 239 : i32
      %401 = tpu.dynamic_rotate %30 by %c239_i32_124 dim 1 : vector<1x256xf32>, i32 -> vector<1x256xf32>
      %cst_125 = arith.constant 0.000000e+00 : f32
      %402 = vector.broadcast %cst_125 : f32 to vector<1x256xf32>
      %403 = arith.select %378, %401, %402 : vector<1x256xi1>, vector<1x256xf32>
      %c239_i32_126 = arith.constant 239 : i32
      %404 = tpu.dynamic_rotate %31 by %c239_i32_126 dim 1 : vector<1x256xf32>, i32 -> vector<1x256xf32>
      %cst_127 = arith.constant 0.000000e+00 : f32
      %405 = vector.broadcast %cst_127 : f32 to vector<1x256xf32>
      %406 = arith.select %378, %404, %405 : vector<1x256xi1>, vector<1x256xf32>
      %407 = vector.broadcast %399 : f32 to vector<1x256xf32>
      %408 = arith.mulf %407, %403 : vector<1x256xf32>
      %409 = arith.addf %392, %408 : vector<1x256xf32>
      %410 = vector.broadcast %400 : f32 to vector<1x256xf32>
      %411 = arith.mulf %410, %406 : vector<1x256xf32>
      %412 = arith.subf %409, %411 : vector<1x256xf32>
      %413 = vector.broadcast %399 : f32 to vector<1x256xf32>
      %414 = arith.mulf %413, %406 : vector<1x256xf32>
      %415 = arith.addf %398, %414 : vector<1x256xf32>
      %416 = vector.broadcast %400 : f32 to vector<1x256xf32>
      %417 = arith.mulf %416, %403 : vector<1x256xf32>
      %418 = arith.addf %415, %417 : vector<1x256xf32>
      %419 = arith.negf %412 : vector<1x256xf32>
      %420 = math.exp %419 : vector<1x256xf32>
      %cst_128 = arith.constant 1.000000e+00 : f32
      %421 = vector.broadcast %cst_128 : f32 to vector<1x256xf32>
      %422 = arith.addf %421, %420 : vector<1x256xf32>
      %423 = arith.divf %421, %422 : vector<1x256xf32>
      %c0_129 = arith.constant 0 : index
      %c0_130 = arith.constant 0 : index
      %c0_131 = arith.constant 0 : index
      %424 = vector.load %arg6[%c0_129, %c0_130, %c0_131] : memref<1x1x256xf32, #tpu.memory_space<vmem>>, vector<1x1x256xf32>
      %425 = vector.shape_cast %424 : vector<1x1x256xf32> to vector<1x256xf32>
      %426 = vector.shape_cast %423 : vector<1x256xf32> to vector<1x1x256xf32>
      tpu.vector_store %arg6[%c0_129, %c0_130, %c0_131], %426 {strides = array<i32>} : memref<1x1x256xf32, #tpu.memory_space<vmem>>, vector<1x1x256xf32>,
      %427 = arith.negf %418 : vector<1x256xf32>
      %428 = math.exp %427 : vector<1x256xf32>
      %cst_132 = arith.constant 1.000000e+00 : f32
      %429 = vector.broadcast %cst_132 : f32 to vector<1x256xf32>
      %430 = arith.addf %429, %428 : vector<1x256xf32>
      %431 = arith.divf %429, %430 : vector<1x256xf32>
      %c0_133 = arith.constant 0 : index
      %c0_134 = arith.constant 0 : index
      %c0_135 = arith.constant 0 : index
      %432 = vector.load %arg7[%c0_133, %c0_134, %c0_135] : memref<1x1x256xf32, #tpu.memory_space<vmem>>, vector<1x1x256xf32>
      %433 = vector.shape_cast %432 : vector<1x1x256xf32> to vector<1x256xf32>
      %434 = vector.shape_cast %431 : vector<1x256xf32> to vector<1x1x256xf32>
      tpu.vector_store %arg7[%c0_133, %c0_134, %c0_135], %434 {strides = array<i32>} : memref<1x1x256xf32, #tpu.memory_space<vmem>>, vector<1x1x256xf32>,
    } else {
    }
    return
  }
  func.func @transform_0(%arg0: i32, %arg1: i32) -> i32 {
    %c0_i32 = arith.constant 0 : i32
    %c0_i32_0 = arith.constant 0 : i32
    return %c0_i32 : i32
  }
  func.func @transform_1(%arg0: i32, %arg1: i32) -> i32 {
    %c0_i32 = arith.constant 0 : i32
    %c0_i32_0 = arith.constant 0 : i32
    return %c0_i32 : i32
  }
  func.func @transform_2(%arg0: i32, %arg1: i32) -> (i32, i32, i32) {
    %c0_i32 = arith.constant 0 : i32
    %c0_i32_0 = arith.constant 0 : i32
    return %arg0, %arg1, %c0_i32 : i32, i32, i32
  }
  func.func @transform_3(%arg0: i32, %arg1: i32) -> (i32, i32, i32) {
    %c0_i32 = arith.constant 0 : i32
    %c0_i32_0 = arith.constant 0 : i32
    return %arg0, %arg1, %c0_i32 : i32, i32, i32
  }
  func.func @transform_4(%arg0: i32, %arg1: i32) -> (i32, i32, i32) {
    %c0_i32 = arith.constant 0 : i32
    %c0_i32_0 = arith.constant 0 : i32
    %c0_i32_1 = arith.constant 0 : i32
    return %arg0, %c0_i32, %c0_i32_0 : i32, i32, i32
  }
  func.func @transform_5(%arg0: i32, %arg1: i32) -> (i32, i32, i32) {
    %c0_i32 = arith.constant 0 : i32
    %c0_i32_0 = arith.constant 0 : i32
    %c0_i32_1 = arith.constant 0 : i32
    return %arg0, %c0_i32, %c0_i32_0 : i32, i32, i32
  }
}

</mosaic_0001>

<llo_original>
// kernel: tpu_custom_call.1
$region0: #{tpu_custom_call.1}
  #allocation0 [shape = 'u32[]', space=smem, size = 0x4, offset = 0x4, fixed_abs, tag = 'smem constant byte address 0x4 - core index']
  #allocation1 [shape = 'u32[72,128]{1,0:T(1,128)}', space=vmem, size = 0x9000, scoped, tag = 'internal scratch']
  #allocation2 [shape = 'f32[1,256]{1,0:T(1,128)}', space=vmem, size = 0x400, scoped, tag = 'scratch operand']
  #allocation3 [shape = 'f32[1,256]{1,0:T(1,128)}', space=vmem, size = 0x400, scoped, tag = 'scratch operand']
  #allocation4 [shape = 'f32[1,256]{1,0:T(1,128)}', space=vmem, size = 0x400, scoped, tag = 'scratch operand']
  #allocation5 [shape = 'f32[1,256]{1,0:T(1,128)}', space=vmem, size = 0x400, scoped, tag = 'scratch operand']
  %s0 = inlined_call_operand.hbm [shape: f32[18], index: 0, kind: input, shape index: {}]
  %s1 = inlined_call_operand.hbm [shape: f32[18], index: 1, kind: input, shape index: {}]
  %s2 = inlined_call_operand.hbm [shape: f32[2,4,256], index: 2, kind: input, shape index: {}]
  %s3 = inlined_call_operand.hbm [shape: f32[2,4,256], index: 3, kind: input, shape index: {}]
  %s4 = inlined_call_operand.hbm [shape: f32[2,1,256], index: 4, kind: output, shape index: {0}]
  %s5 = inlined_call_operand.hbm [shape: f32[2,1,256], index: 5, kind: output, shape index: {1}]
  %6 = xla_tuple %s4, %s5
  %s7 = sld [smem:[#allocation0]]
  $region81: #{tpu_custom_call.1} parent=0
    _
  %s9 = ssub.s32 1, %s7
  %s10 = scalar_select 0, %s9, %s7
  $region1: #{tpu_custom_call.1} parent=0
    #allocation6 [shape = 'u8[512]{0}', space=smem, size = 0x200, scoped, tag = 'input window, operand 0, single buffered']
    #allocation7 [shape = 's32[2]{0}', space=sflag, size = 0x8, scoped, tag = 'scoped memory for tpu_custom_call.1']
    #allocation8 [shape = 's32[2]{0}', space=sflag, size = 0x8, scoped, tag = 'scoped memory for tpu_custom_call.1']
    #allocation9 [shape = 's32[2]{0}', space=sflag, size = 0x8, scoped, tag = 'scoped memory for tpu_custom_call.1']
    #allocation10 [shape = 'u8[512]{0}', space=smem, size = 0x200, scoped, tag = 'input window, operand 1, single buffered']
    #allocation11 [shape = 's32[1]{0}', space=sflag, size = 0x4, scoped, tag = 'scoped memory for tpu_custom_call.1']
    #allocation12 [shape = 'u8[8192]{0}', space=vmem, size = 0x2000, scoped, tag = 'input window, operand 2']
    #allocation13 [shape = 'u8[8192]{0}', space=vmem, size = 0x2000, scoped, tag = 'input window, operand 3']
    #allocation14 [shape = 's32[2]{0}', space=sflag, size = 0x8, scoped, tag = 'scoped memory for tpu_custom_call.1']
    #allocation15 [shape = 'u8[2048]{0}', space=vmem, size = 0x800, scoped, tag = 'output window, operand 0']
    #allocation16 [shape = 'u8[2048]{0}', space=vmem, size = 0x800, scoped, tag = 'output window, operand 1']
    #allocation17 [shape = 's32[2]{0}', space=sflag, size = 0x8, scoped, tag = 'scoped memory for tpu_custom_call.1']
    %11 = vsyncpa [#allocation9], 0
    %12 = vsyncpa [#allocation11], 0
    %13 = vsyncpa [#allocation7], 0
    %s14 = scalar_lea.sflag [#allocation7], 1
    %15 = vsyncpa %s14, 0
    %16 = vsyncpa [#allocation14], 0
    %s17 = scalar_lea.sflag [#allocation14], 1
    %18 = vsyncpa %s17, 0
    %19 = vsyncpa [#allocation8], 0
    %s20 = scalar_lea.sflag [#allocation8], 1
    %21 = vsyncpa %s20, 0
    %22 = vsyncpa [#allocation17], 0
    %s23 = scalar_lea.sflag [#allocation17], 1
    %24 = vsyncpa %s23, 0
    loop: start=0, step=1, limit=4
    $region2: #{tpu_custom_call.1} parent=1 // loop_pre_header
      _
    $region3: #{tpu_custom_call.1} parent=1 // loop_header
      %s26 = sphi 0, %s30
      %p27 = scmp.ge.s32.totalorder %s26, 4
      %s33 = sphi 0, %s45
      %s34 = sphi 0, %s41
      %s35 = sphi 0, %s33
      %s36 = sphi 0, %s34
      %s37 = sphi 0, %s35
      %s38 = sphi 0, %s36
      %s46 = sphi 0, %s46
      %s48 = sphi 0, %s46
      %s49 = sphi 0, %s48
      %s63 = sphi 0, %s49
      %s67 = sphi 0, %s67
      %s69 = sphi 0, %s67
      %s70 = sphi 0, %s69
      %s84 = sphi 0, %s70
      %s92 = sphi 0, %s94
      %s95 = sphi 0, %s92
      %s96 = sphi 0, %s95
      %s112 = sphi 0, %s96
      %s120 = sphi 0, %s122
      %s123 = sphi 0, %s120
      %s124 = sphi 0, %s123
      %s140 = sphi 0, %s124
      %s146 = sphi 0, %s148
      %s149 = sphi 0, %s146
      %s150 = sphi 0, %s149
      %s166 = sphi 0, %s150
      %s172 = sphi 0, %s174
      %s175 = sphi 0, %s172
      %s176 = sphi 0, %s175
      %s192 = sphi 0, %s176
    $region4: #{tpu_custom_call.1} parent=1 // loop_header_branch
      %29 = sbr.rel (%p27) target = $region8
    $region5: #{tpu_custom_call.1} parent=1 // loop_body
      %s31 = ssub.s32 %s26, 1
      %s32 = ssub.s32 %s26, 2
      %s39 = sadd.s32 1, %s34
      %p40 = scmp.ge.s32.totalorder %s39, 1
      %s41 = scalar_select %p40, 0, %s39
      %s42 = sadd.s32 1, %s33
      %s43 = scalar_select %p40, %s42, %s33
      %p44 = scmp.ge.s32.totalorder %s43, 2
      %s45 = scalar_select %p44, 0, %s43
      %s47 = sadd.s32 %s46, 1
      %p50 = scmp.eq.s32.totalorder %s26, 1
      %p51 = scmp.ne.s32.totalorder %s46, %s48
      %p52 = scmp.eq.s32.totalorder %s26, 0
      %p53 = por %p51, %p52
      %p54 = scmp.ne.s32.totalorder %s46, %s48
      %p55 = scmp.eq.s32.totalorder %s31, 1
      %p56 = por %p54, %p55
      %p57 = scmp.ne.s32.totalorder %s48, %s49
      %p58 = scmp.eq.s32.totalorder %s31, 0
      %p59 = por %p57, %p58
      %p60 = scmp.ne.s32.totalorder %s48, %s49
      %p61 = scmp.eq.s32.totalorder %s32, 1
      %p62 = por %p60, %p61
      %p64 = scmp.ne.s32.totalorder %s49, %s63
      %p65 = scmp.eq.s32.totalorder %s32, 0
      %p66 = por %p64, %p65
      %s68 = sadd.s32 %s67, 1
      %p71 = scmp.eq.s32.totalorder %s26, 1
      %p72 = scmp.ne.s32.totalorder %s67, %s69
      %p73 = scmp.eq.s32.totalorder %s26, 0
      %p74 = por %p72, %p73
      %p75 = scmp.ne.s32.totalorder %s67, %s69
      %p76 = scmp.eq.s32.totalorder %s31, 1
      %p77 = por %p75, %p76
      %p78 = scmp.ne.s32.totalorder %s69, %s70
      %p79 = scmp.eq.s32.totalorder %s31, 0
      %p80 = por %p78, %p79
      %p81 = scmp.ne.s32.totalorder %s69, %s70
      %p82 = scmp.eq.s32.totalorder %s32, 1
      %p83 = por %p81, %p82
      %p85 = scmp.ne.s32.totalorder %s70, %s84
      %p86 = scmp.eq.s32.totalorder %s32, 0
      %p87 = por %p85, %p86
      %s88 = ssub.s32 %s33, %s45
      %s89 = ssub.s32 %s34, %s41
      %s90 = sor.u32 %s88, %s89
      %p91 = scmp.eq.s32.totalorder %s90, 0
      %s93 = sadd.s32 %s92, 1
      %s94 = scalar_select %p91, %s92, %s93
      %p97 = pneg %p91
      %p98 = scmp.eq.s32.totalorder %s26, 1
      %p99 = por %p97, %p98
      %p100 = scmp.ne.s32.totalorder %s92, %s95
      %p101 = scmp.eq.s32.totalorder %s26, 0
      %p102 = por %p100, %p101
      %p103 = scmp.ne.s32.totalorder %s92, %s95
      %p104 = scmp.eq.s32.totalorder %s31, 1
      %p105 = por %p103, %p104
      %p106 = scmp.ne.s32.totalorder %s95, %s96
      %p107 = scmp.eq.s32.totalorder %s31, 0
      %p108 = por %p106, %p107
      %p109 = scmp.ne.s32.totalorder %s95, %s96
      %p110 = scmp.eq.s32.totalorder %s32, 1
      %p111 = por %p109, %p110
      %p113 = scmp.ne.s32.totalorder %s96, %s112
      %p114 = scmp.eq.s32.totalorder %s32, 0
      %p115 = por %p113, %p114
      %s116 = ssub.s32 %s33, %s45
      %s117 = ssub.s32 %s34, %s41
      %s118 = sor.u32 %s116, %s117
      %p119 = scmp.eq.s32.totalorder %s118, 0
      %s121 = sadd.s32 %s120, 1
      %s122 = scalar_select %p119, %s120, %s121
      %p125 = pneg %p119
      %p126 = scmp.eq.s32.totalorder %s26, 1
      %p127 = por %p125, %p126
      %p128 = scmp.ne.s32.totalorder %s120, %s123
      %p129 = scmp.eq.s32.totalorder %s26, 0
      %p130 = por %p128, %p129
      %p131 = scmp.ne.s32.totalorder %s120, %s123
      %p132 = scmp.eq.s32.totalorder %s31, 1
      %p133 = por %p131, %p132
      %p134 = scmp.ne.s32.totalorder %s123, %s124
      %p135 = scmp.eq.s32.totalorder %s31, 0
      %p136 = por %p134, %p135
      %p137 = scmp.ne.s32.totalorder %s123, %s124
      %p138 = scmp.eq.s32.totalorder %s32, 1
      %p139 = por %p137, %p138
      %p141 = scmp.ne.s32.totalorder %s124, %s140
      %p142 = scmp.eq.s32.totalorder %s32, 0
      %p143 = por %p141, %p142
      %s144 = ssub.s32 %s33, %s45
      %p145 = scmp.eq.s32.totalorder %s144, 0
      %s147 = sadd.s32 %s146, 1
      %s148 = scalar_select %p145, %s146, %s147
      %p151 = pneg %p145
      %p152 = scmp.eq.s32.totalorder %s26, 1
      %p153 = por %p151, %p152
      %p154 = scmp.ne.s32.totalorder %s146, %s149
      %p155 = scmp.eq.s32.totalorder %s26, 0
      %p156 = por %p154, %p155
      %p157 = scmp.ne.s32.totalorder %s146, %s149
      %p158 = scmp.eq.s32.totalorder %s31, 1
      %p159 = por %p157, %p158
      %p160 = scmp.ne.s32.totalorder %s149, %s150
      %p161 = scmp.eq.s32.totalorder %s31, 0
      %p162 = por %p160, %p161
      %p163 = scmp.ne.s32.totalorder %s149, %s150
      %p164 = scmp.eq.s32.totalorder %s32, 1
      %p165 = por %p163, %p164
      %p167 = scmp.ne.s32.totalorder %s150, %s166
      %p168 = scmp.eq.s32.totalorder %s32, 0
      %p169 = por %p167, %p168
      %s170 = ssub.s32 %s33, %s45
      %p171 = scmp.eq.s32.totalorder %s170, 0
      %s173 = sadd.s32 %s172, 1
      %s174 = scalar_select %p171, %s172, %s173
      %p177 = pneg %p171
      %p178 = scmp.eq.s32.totalorder %s26, 1
      %p179 = por %p177, %p178
      %p180 = scmp.ne.s32.totalorder %s172, %s175
      %p181 = scmp.eq.s32.totalorder %s26, 0
      %p182 = por %p180, %p181
      %p183 = scmp.ne.s32.totalorder %s172, %s175
      %p184 = scmp.eq.s32.totalorder %s31, 1
      %p185 = por %p183, %p184
      %p186 = scmp.ne.s32.totalorder %s175, %s176
      %p187 = scmp.eq.s32.totalorder %s31, 0
      %p188 = por %p186, %p187
      %p189 = scmp.ne.s32.totalorder %s175, %s176
      %p190 = scmp.eq.s32.totalorder %s32, 1
      %p191 = por %p189, %p190
      %p193 = scmp.ne.s32.totalorder %s176, %s192
      %p194 = scmp.eq.s32.totalorder %s32, 0
      %p195 = por %p193, %p194
      %p196 = scmp.le.s32.totalorder 1, %s26
      %p197 = scmp.lt.s32.totalorder %s26, 3
      %p198 = pnand %p196, %p197
      %p199 = pneg %p198
      // Predicated region
      $region9: #{tpu_custom_call.1} parent=5 // pred_check
        _
      $region10: #{tpu_custom_call.1} parent=5 // pred_check_branch
        %201 = sbr.rel (%p198) target = $region12
      $region11: #{tpu_custom_call.1} parent=5 // pred_region
        %s202 = ssub.s32 %s26, 1
        // Predicated region
        $region13: #{tpu_custom_call.1} parent=11 // pred_check
          %p203 = pneg %p59
        $region14: #{tpu_custom_call.1} parent=11 // pred_check_branch
          %205 = sbr.rel (%p203) target = $region16
        $region15: #{tpu_custom_call.1} parent=11 // pred_region
          %207 = vsyncadd [#allocation9], 0
          %s209 = sshll.u32 %s0, 4
          %s210 = int_to_ptr.hbm [resolvable:$true] %s209
          %212 = dma.hbm_to_smem %s210, 16, [#allocation6], [#allocation9]
        $region16: #{tpu_custom_call.1} parent=11 // pred_fallthru
          _
        // Predicated region
        $region17: #{tpu_custom_call.1} parent=11 // pred_check
          %p213 = pneg %p80
        $region18: #{tpu_custom_call.1} parent=11 // pred_check_branch
          %215 = sbr.rel (%p213) target = $region20
        $region19: #{tpu_custom_call.1} parent=11 // pred_region
          %217 = vsyncadd [#allocation11], 0
          %s219 = sshll.u32 %s1, 4
          %s220 = int_to_ptr.hbm [resolvable:$true] %s219
          %222 = dma.hbm_to_smem %s220, 16, [#allocation10], [#allocation11]
        $region20: #{tpu_custom_call.1} parent=11 // pred_fallthru
          _
      $region12: #{tpu_custom_call.1} parent=5 // pred_fallthru
        _
      %p223 = scmp.lt.s32.totalorder %s26, 2
      // Predicated region
      $region21: #{tpu_custom_call.1} parent=5 // pred_check
        %p224 = pneg %p223
      $region22: #{tpu_custom_call.1} parent=5 // pred_check_branch
        %226 = sbr.rel (%p224) target = $region24
      $region23: #{tpu_custom_call.1} parent=5 // pred_region
        // Predicated region
        $region25: #{tpu_custom_call.1} parent=23 // pred_check
          %p227 = pneg %p102
        $region26: #{tpu_custom_call.1} parent=23 // pred_check_branch
          %229 = sbr.rel (%p227) target = $region28
        $region27: #{tpu_custom_call.1} parent=23 // pred_region
          %s230 = sand.u32 %s92, 1
          %s231 = scalar_lea.sflag [#allocation7], %s230
          %s232 = sand.u32 %s92, 1
          %s233 = smul.addr %s232, 8
          %s234 = scalar_lea.vmem [#allocation12], %s233
          %236 = vsyncadd %s231, 0
          %s237 = smul.addr %s34, 2
          %s238 = smul.addr %s33, 2
          %s239 = sadd.s32 %s237, %s238
          %s240 = smul.addr %s239, 4
          %s241 = scalar_lea.hbm %s2, %s240
          %s243 = sshll.u32 %s241, 4
          %s244 = int_to_ptr.hbm [resolvable:$true] %s243
          %s245 = sshll.u32 %s234, 4
          %s246 = int_to_ptr.vmem [resolvable:$true] %s245
          %248 = dma.hbm_to_vmem [thread:$0]  %s244, 128, %s246, %s231
        $region28: #{tpu_custom_call.1} parent=23 // pred_fallthru
          _
        // Predicated region
        $region29: #{tpu_custom_call.1} parent=23 // pred_check
          %p249 = pneg %p130
        $region30: #{tpu_custom_call.1} parent=23 // pred_check_branch
          %251 = sbr.rel (%p249) target = $region32
        $region31: #{tpu_custom_call.1} parent=23 // pred_region
          %s252 = sand.u32 %s120, 1
          %s253 = scalar_lea.sflag [#allocation14], %s252
          %s254 = sand.u32 %s120, 1
          %s255 = smul.addr %s254, 8
          %s256 = scalar_lea.vmem [#allocation13], %s255
          %258 = vsyncadd %s253, 0
          %s259 = smul.addr %s34, 2
          %s260 = smul.addr %s33, 2
          %s261 = sadd.s32 %s259, %s260
          %s262 = smul.addr %s261, 4
          %s263 = scalar_lea.hbm %s3, %s262
          %s265 = sshll.u32 %s263, 4
          %s266 = int_to_ptr.hbm [resolvable:$true] %s265
          %s267 = sshll.u32 %s256, 4
          %s268 = int_to_ptr.vmem [resolvable:$true] %s267
          %270 = dma.hbm_to_vmem [thread:$0]  %s266, 128, %s268, %s253
        $region32: #{tpu_custom_call.1} parent=23 // pred_fallthru
          _
      $region24: #{tpu_custom_call.1} parent=5 // pred_fallthru
        _
      %p271 = scmp.le.s32.totalorder 1, %s26
      %p272 = scmp.lt.s32.totalorder %s26, 3
      %p273 = pnand %p271, %p272
      %p274 = pneg %p273
      // Predicated region
      $region33: #{tpu_custom_call.1} parent=5 // pred_check
        _
      $region34: #{tpu_custom_call.1} parent=5 // pred_check_branch
        %276 = sbr.rel (%p273) target = $region36
      $region35: #{tpu_custom_call.1} parent=5 // pred_region
        %s277 = ssub.s32 %s26, 1
        // Predicated region
        $region37: #{tpu_custom_call.1} parent=35 // pred_check
          %p278 = pneg %p59
        $region38: #{tpu_custom_call.1} parent=35 // pred_check_branch
          %280 = sbr.rel (%p278) target = $region40
        $region39: #{tpu_custom_call.1} parent=35 // pred_region
          %282 = dma.done [#allocation9], 16
        $region40: #{tpu_custom_call.1} parent=35 // pred_fallthru
          _
        // Predicated region
        $region41: #{tpu_custom_call.1} parent=35 // pred_check
          %p283 = pneg %p80
        $region42: #{tpu_custom_call.1} parent=35 // pred_check_branch
          %285 = sbr.rel (%p283) target = $region44
        $region43: #{tpu_custom_call.1} parent=35 // pred_region
          %287 = dma.done [#allocation11], 16
        $region44: #{tpu_custom_call.1} parent=35 // pred_fallthru
          _
        %s288 = sand.u32 %s95, 1
        %s289 = scalar_lea.sflag [#allocation7], %s288
        %s290 = sand.u32 %s95, 1
        %s291 = smul.addr %s290, 8
        %s292 = scalar_lea.vmem [#allocation12], %s291
        // Predicated region
        $region45: #{tpu_custom_call.1} parent=35 // pred_check
          %p293 = pneg %p108
        $region46: #{tpu_custom_call.1} parent=35 // pred_check_branch
          %295 = sbr.rel (%p293) target = $region48
        $region47: #{tpu_custom_call.1} parent=35 // pred_region
          %297 = dma.done %s289, 128
        $region48: #{tpu_custom_call.1} parent=35 // pred_fallthru
          _
        %s298 = sand.u32 %s123, 1
        %s299 = scalar_lea.sflag [#allocation14], %s298
        %s300 = sand.u32 %s123, 1
        %s301 = smul.addr %s300, 8
        %s302 = scalar_lea.vmem [#allocation13], %s301
        // Predicated region
        $region49: #{tpu_custom_call.1} parent=35 // pred_check
          %p303 = pneg %p136
        $region50: #{tpu_custom_call.1} parent=35 // pred_check_branch
          %305 = sbr.rel (%p303) target = $region52
        $region51: #{tpu_custom_call.1} parent=35 // pred_region
          %307 = dma.done %s299, 128
        $region52: #{tpu_custom_call.1} parent=35 // pred_fallthru
          _
        %308 = sfence
        %p309 = pneg %p59
        %p310 = pneg %p56
        %p311 = pneg %p80
        %p312 = pneg %p77
        %s313 = sand.u32 %s95, 1
        %s314 = scalar_lea.sflag [#allocation7], %s313
        %s315 = sand.u32 %s95, 1
        %s316 = smul.addr %s315, 8
        %s317 = scalar_lea.vmem [#allocation12], %s316
        %p318 = pneg %p108
        %p319 = pneg %p105
        %s320 = sand.u32 %s123, 1
        %s321 = scalar_lea.sflag [#allocation14], %s320
        %s322 = sand.u32 %s123, 1
        %s323 = smul.addr %s322, 8
        %s324 = scalar_lea.vmem [#allocation13], %s323
        %p325 = pneg %p136
        %p326 = pneg %p133
        %p327 = pneg %p162
        %p328 = pneg %p159
        %s329 = sand.u32 %s149, 1
        %s330 = scalar_lea.sflag [#allocation8], %s329
        %s331 = sand.u32 %s149, 1
        %s332 = smul.addr %s331, 2
        %s333 = scalar_lea.vmem [#allocation15], %s332
        %p334 = pneg %p188
        %p335 = pneg %p185
        %s336 = sand.u32 %s175, 1
        %s337 = scalar_lea.sflag [#allocation17], %s336
        %s338 = sand.u32 %s175, 1
        %s339 = smul.addr %s338, 2
        %s340 = scalar_lea.vmem [#allocation16], %s339
        %v341 = vld [vmem:[%s292] sm:$0xff]
        %v342 = vld [vmem:[%s302] sm:$0xff]
        %p343 = scmp.eq.s32.totalorder %s36, 0
        // Predicated region
        $region53: #{tpu_custom_call.1} parent=35 // pred_check
          %p344 = pneg %p343
        $region54: #{tpu_custom_call.1} parent=35 // pred_check_branch
          %346 = sbr.rel (%p344) target = $region56
        $region55: #{tpu_custom_call.1} parent=35 // pred_region
          %v347 = vlaneseq
          %vm348 = vcmp.ge.s32.totalorder %v347, 0
          %vm349 = vcmp.lt.s32.totalorder %v347, 256
          %vm350 = vmand %vm348, %vm349
          %351 = vst.msk [vmem:[#allocation2] sm:$0x3] %vm350, 0.0
          %352 = vst.msk [vmem:[#allocation3] sm:$0x3] %vm350, 0.0
          %353 = vst.msk [vmem:[#allocation4] sm:$0x3] %vm350, -inf
          %354 = vst.msk [vmem:[#allocation5] sm:$0x3] %vm350, -inf
        $region56: #{tpu_custom_call.1} parent=35 // pred_fallthru
          _
        %v355 = vld [vmem:[#allocation2] sm:$0x3]
        %357 = vst [vmem:[#allocation1] ss:$2 sm:$0xff] %v341
        %v358 = vld.sshfl [vmem:[#allocation1] sm:$0xff pattern:$0x75316420]
        %v359 = vld.sshfl [vmem:[#allocation1 + $0x8] sm:$0xff pattern:$0x75316420]
        %vm362 = vcmask 1043456
        %v363 = vsel %vm362, %v358, 0.0
        %v364 = vrot.slane %v363, 4
        %v365 = vadd.f32 %v363, %v364
        %v366 = vrot.slane %v365, 2
        %v367 = vadd.f32 %v365, %v366
        %v368 = vrot.slane %v367, 1
        %v369 = vadd.f32 %v367, %v368
        %v370 = vsel %vm362, %v359, 0.0
        %v371 = vrot.slane %v370, 4
        %v372 = vadd.f32 %v370, %v371
        %v373 = vrot.slane %v372, 2
        %v374 = vadd.f32 %v372, %v373
        %v375 = vrot.slane %v374, 1
        %v376 = vadd.f32 %v374, %v375
        %v379 = vrot.slane %v376, 7
        %vm380 = vcmask 1040384
        %v381 = vsel %vm380, %v369, %v379
        %v383 = vadd.f32 %v355, %v381
        %v384 = vlaneseq
        %vm385 = vcmp.ge.s32.totalorder %v384, 0
        %vm386 = vcmp.lt.s32.totalorder %v384, 256
        %vm387 = vmand %vm385, %vm386
        %388 = vst.msk [vmem:[#allocation2] sm:$0x3] %vm387, %v383
        %v389 = vld [vmem:[#allocation3] sm:$0x3]
        %391 = vst [vmem:[#allocation1] ss:$2 sm:$0xff] %v342
        %v392 = vld.sshfl [vmem:[#allocation1] sm:$0xff pattern:$0x75316420]
        %v393 = vld.sshfl [vmem:[#allocation1 + $0x8] sm:$0xff pattern:$0x75316420]
        %v396 = vsel %vm362, %v392, 0.0
        %v397 = vrot.slane %v396, 4
        %v398 = vadd.f32 %v396, %v397
        %v399 = vrot.slane %v398, 2
        %v400 = vadd.f32 %v398, %v399
        %v401 = vrot.slane %v400, 1
        %v402 = vadd.f32 %v400, %v401
        %v403 = vsel %vm362, %v393, 0.0
        %v404 = vrot.slane %v403, 4
        %v405 = vadd.f32 %v403, %v404
        %v406 = vrot.slane %v405, 2
        %v407 = vadd.f32 %v405, %v406
        %v408 = vrot.slane %v407, 1
        %v409 = vadd.f32 %v407, %v408
        %v412 = vrot.slane %v409, 7
        %v413 = vsel %vm380, %v402, %v412
        %v415 = vadd.f32 %v389, %v413
        %416 = vst.msk [vmem:[#allocation3] sm:$0x3] %vm387, %v415
        %v417 = vld [vmem:[#allocation4] sm:$0x3]
        %418 = vst [vmem:[#allocation1] ss:$2 sm:$0xff] %v341
        %v419 = vld.sshfl [vmem:[#allocation1] sm:$0xff pattern:$0x75316420]
        %v420 = vld.sshfl [vmem:[#allocation1 + $0x8] sm:$0xff pattern:$0x75316420]
        %v423 = vsel %vm362, %v419, -inf
        %v424 = vrot.slane %v423, 4
        %v425 = vmax.f32 %v423, %v424
        %v426 = vrot.slane %v425, 2
        %v427 = vmax.f32 %v425, %v426
        %v428 = vrot.slane %v427, 1
        %v429 = vmax.f32 %v427, %v428
        %v430 = vsel %vm362, %v420, -inf
        %v431 = vrot.slane %v430, 4
        %v432 = vmax.f32 %v430, %v431
        %v433 = vrot.slane %v432, 2
        %v434 = vmax.f32 %v432, %v433
        %v435 = vrot.slane %v434, 1
        %v436 = vmax.f32 %v434, %v435
        %v439 = vrot.slane %v436, 7
        %v440 = vsel %vm380, %v429, %v439
        %v442 = vmax.f32 %v417, %v440
        %443 = vst.msk [vmem:[#allocation4] sm:$0x3] %vm387, %v442
        %v444 = vld [vmem:[#allocation5] sm:$0x3]
        %445 = vst [vmem:[#allocation1] ss:$2 sm:$0xff] %v342
        %v446 = vld.sshfl [vmem:[#allocation1] sm:$0xff pattern:$0x75316420]
        %v447 = vld.sshfl [vmem:[#allocation1 + $0x8] sm:$0xff pattern:$0x75316420]
        %v450 = vsel %vm362, %v446, -inf
        %v451 = vrot.slane %v450, 4
        %v452 = vmax.f32 %v450, %v451
        %v453 = vrot.slane %v452, 2
        %v454 = vmax.f32 %v452, %v453
        %v455 = vrot.slane %v454, 1
        %v456 = vmax.f32 %v454, %v455
        %v457 = vsel %vm362, %v447, -inf
        %v458 = vrot.slane %v457, 4
        %v459 = vmax.f32 %v457, %v458
        %v460 = vrot.slane %v459, 2
        %v461 = vmax.f32 %v459, %v460
        %v462 = vrot.slane %v461, 1
        %v463 = vmax.f32 %v461, %v462
        %v466 = vrot.slane %v463, 7
        %v467 = vsel %vm380, %v456, %v466
        %v469 = vmax.f32 %v444, %v467
        %470 = vst.msk [vmem:[#allocation5] sm:$0x3] %vm387, %v469
        // Predicated region
        $region57: #{tpu_custom_call.1} parent=35 // pred_check
          %p471 = pneg %p343
        $region58: #{tpu_custom_call.1} parent=35 // pred_check_branch
          %473 = sbr.rel (%p471) target = $region60
        $region59: #{tpu_custom_call.1} parent=35 // pred_region
          %v474 = vld [vmem:[#allocation2] sm:$0x3]
          %v475 = vmul.f32 %v474, 0.25
          %v476 = vld [vmem:[#allocation3] sm:$0x3]
          %v477 = vmul.f32 %v476, 0.25
          %v478 = vld [vmem:[#allocation4] sm:$0x3]
          %v479 = vld [vmem:[#allocation5] sm:$0x3]
          %v480 = vlaneseq
          %v481 = vand.u32 %v480, 127
          %v482 = vadd.s32 %v481, 128
          %vm483 = vcmp.lt.s32.totalorder %v481, 0
          %v484 = vsub.s32 0, %v481
          %v485 = vsel %vm483, %v484, %v481
          %v486 = vshrl.u32 %v485, 4
          %v487 = vand.u32 %v485, 15
          %v488 = vsub.s32 0, %v487
          %v489 = vsel %vm483, %v488, %v487
          %vm490 = vcmp.lt.s32.totalorder %v482, 0
          %v491 = vsub.s32 0, %v482
          %v492 = vsel %vm490, %v491, %v482
          %v493 = vshrl.u32 %v492, 4
          %v494 = vand.u32 %v492, 15
          %v495 = vsub.s32 0, %v494
          %v496 = vsel %vm490, %v495, %v494
          %vm497 = vcmp.ne.s32.totalorder %v489, 0
          %vm498 = vcmp.ne.s32.totalorder %v496, 0
          %vm499 = vcmp.lt.s32.totalorder %v489, 0
          %vm500 = vcmp.lt.s32.totalorder %v496, 0
          %vm501 = vmand %vm499, %vm497
          %vm502 = vmand %vm500, %vm498
          %v503 = vadd.s32 %v489, 16
          %v504 = vadd.s32 %v496, 16
          %v505 = vsel %vm501, %v503, %v489
          %v506 = vsel %vm502, %v504, %v496
          %vm507 = vcmp.ge.s32.totalorder %v481, 16
          %vm508 = vcmp.ge.s32.totalorder %v482, 16
          %vm509 = vcmp.ge.s32.totalorder %v505, 1
          %vm510 = vcmp.ge.s32.totalorder %v506, 1
          %vm511 = vmand %vm507, %vm509
          %vm512 = vmand %vm508, %vm510
          %s513 = sld [smem:[#allocation6]]
          %s514 = sld [smem:[#allocation10]]
          %v516 = vperm.slane %v475, 0
          %v517 = vperm.slane %v475, 1
          %520 = vrot.lane.b32.xlu0 %v516, 17
          %v521 = vpop.permute.xlu0 %520
          %522 = vrot.lane.b32.xlu0 %v517, 17
          %v523 = vpop.permute.xlu0 %522
          %vm524 = vcmp.lt.s32.totalorder %v481, 17
          %v525 = vsel %vm524, %v521, %v523
          %v526 = vsel %vm524, %v523, %v521
          %v527 = vsel %vm511, %v526, 0.0
          %v528 = vsel %vm512, %v525, 0.0
          %v530 = vperm.slane %v477, 0
          %v531 = vperm.slane %v477, 1
          %534 = vrot.lane.b32.xlu0 %v530, 17
          %v535 = vpop.permute.xlu0 %534
          %536 = vrot.lane.b32.xlu0 %v531, 17
          %v537 = vpop.permute.xlu0 %536
          %v538 = vsel %vm524, %v535, %v537
          %v539 = vsel %vm524, %v537, %v535
          %v540 = vsel %vm511, %v539, 0.0
          %v541 = vsel %vm512, %v538, 0.0
          %v542 = vstv %s513
          %v543 = vmul.f32 %v542, %v527
          %v544 = vmul.f32 %v542, %v528
          %v545 = vadd.f32 %v543, 0.0
          %v546 = vadd.f32 %v544, 0.0
          %v547 = vstv %s514
          %v548 = vmul.f32 %v547, %v540
          %v549 = vmul.f32 %v547, %v541
          %v550 = vsub.f32 %v545, %v548
          %v551 = vsub.f32 %v546, %v549
          %v552 = vmul.f32 %v542, %v540
          %v553 = vmul.f32 %v542, %v541
          %v554 = vadd.f32 %v552, 0.0
          %v555 = vadd.f32 %v553, 0.0
          %v556 = vmul.f32 %v547, %v527
          %v557 = vmul.f32 %v547, %v528
          %v558 = vadd.f32 %v554, %v556
          %v559 = vadd.f32 %v555, %v557
          %s560 = sld [smem:[#allocation6 + $0x9]]
          %s561 = sld [smem:[#allocation10 + $0x9]]
          %v563 = vperm.slane %v478, 0
          %v564 = vperm.slane %v478, 1
          %567 = vrot.lane.b32.xlu0 %v563, 17
          %v568 = vpop.permute.xlu0 %567
          %569 = vrot.lane.b32.xlu0 %v564, 17
          %v570 = vpop.permute.xlu0 %569
          %v571 = vsel %vm524, %v568, %v570
          %v572 = vsel %vm524, %v570, %v568
          %v573 = vsel %vm511, %v572, 0.0
          %v574 = vsel %vm512, %v571, 0.0
          %v576 = vperm.slane %v479, 0
          %v577 = vperm.slane %v479, 1
          %580 = vrot.lane.b32.xlu0 %v576, 17
          %v581 = vpop.permute.xlu0 %580
          %582 = vrot.lane.b32.xlu0 %v577, 17
          %v583 = vpop.permute.xlu0 %582
          %v584 = vsel %vm524, %v581, %v583
          %v585 = vsel %vm524, %v583, %v581
          %v586 = vsel %vm511, %v585, 0.0
          %v587 = vsel %vm512, %v584, 0.0
          %v588 = vstv %s560
          %v589 = vmul.f32 %v588, %v573
          %v590 = vmul.f32 %v588, %v574
          %v591 = vadd.f32 %v550, %v589
          %v592 = vadd.f32 %v551, %v590
          %v593 = vstv %s561
          %v594 = vmul.f32 %v593, %v586
          %v595 = vmul.f32 %v593, %v587
          %v596 = vsub.f32 %v591, %v594
          %v597 = vsub.f32 %v592, %v595
          %v598 = vmul.f32 %v588, %v586
          %v599 = vmul.f32 %v588, %v587
          %v600 = vadd.f32 %v558, %v598
          %v601 = vadd.f32 %v559, %v599
          %v602 = vmul.f32 %v593, %v573
          %v603 = vmul.f32 %v593, %v574
          %v604 = vadd.f32 %v600, %v602
          %v605 = vadd.f32 %v601, %v603
          %s606 = sld [smem:[#allocation6 + $0x1]]
          %s607 = sld [smem:[#allocation10 + $0x1]]
          %608 = vrot.lane.b32.xlu0 %v516, 16
          %v609 = vpop.permute.xlu0 %608
          %610 = vrot.lane.b32.xlu0 %v517, 16
          %v611 = vpop.permute.xlu0 %610
          %vm612 = vcmp.lt.s32.totalorder %v481, 16
          %v613 = vsel %vm612, %v609, %v611
          %v614 = vsel %vm612, %v611, %v609
          %v615 = vsel %vm507, %v614, 0.0
          %v616 = vsel %vm508, %v613, 0.0
          %617 = vrot.lane.b32.xlu0 %v530, 16
          %v618 = vpop.permute.xlu0 %617
          %619 = vrot.lane.b32.xlu0 %v531, 16
          %v620 = vpop.permute.xlu0 %619
          %v621 = vsel %vm612, %v618, %v620
          %v622 = vsel %vm612, %v620, %v618
          %v623 = vsel %vm507, %v622, 0.0
          %v624 = vsel %vm508, %v621, 0.0
          %v625 = vstv %s606
          %v626 = vmul.f32 %v625, %v615
          %v627 = vmul.f32 %v625, %v616
          %v628 = vadd.f32 %v596, %v626
          %v629 = vadd.f32 %v597, %v627
          %v630 = vstv %s607
          %v631 = vmul.f32 %v630, %v623
          %v632 = vmul.f32 %v630, %v624
          %v633 = vsub.f32 %v628, %v631
          %v634 = vsub.f32 %v629, %v632
          %v635 = vmul.f32 %v625, %v623
          %v636 = vmul.f32 %v625, %v624
          %v637 = vadd.f32 %v604, %v635
          %v638 = vadd.f32 %v605, %v636
          %v639 = vmul.f32 %v630, %v615
          %v640 = vmul.f32 %v630, %v616
          %v641 = vadd.f32 %v637, %v639
          %v642 = vadd.f32 %v638, %v640
          %s643 = sld [smem:[#allocation6 + $0xa]]
          %s644 = sld [smem:[#allocation10 + $0xa]]
          %645 = vrot.lane.b32.xlu0 %v563, 16
          %v646 = vpop.permute.xlu0 %645
          %647 = vrot.lane.b32.xlu0 %v564, 16
          %v648 = vpop.permute.xlu0 %647
          %v649 = vsel %vm612, %v646, %v648
          %v650 = vsel %vm612, %v648, %v646
          %v651 = vsel %vm507, %v650, 0.0
          %v652 = vsel %vm508, %v649, 0.0
          %653 = vrot.lane.b32.xlu0 %v576, 16
          %v654 = vpop.permute.xlu0 %653
          %655 = vrot.lane.b32.xlu0 %v577, 16
          %v656 = vpop.permute.xlu0 %655
          %v657 = vsel %vm612, %v654, %v656
          %v658 = vsel %vm612, %v656, %v654
          %v659 = vsel %vm507, %v658, 0.0
          %v660 = vsel %vm508, %v657, 0.0
          %v661 = vstv %s643
          %v662 = vmul.f32 %v661, %v651
          %v663 = vmul.f32 %v661, %v652
          %v664 = vadd.f32 %v633, %v662
          %v665 = vadd.f32 %v634, %v663
          %v666 = vstv %s644
          %v667 = vmul.f32 %v666, %v659
          %v668 = vmul.f32 %v666, %v660
          %v669 = vsub.f32 %v664, %v667
          %v670 = vsub.f32 %v665, %v668
          %v671 = vmul.f32 %v661, %v659
          %v672 = vmul.f32 %v661, %v660
          %v673 = vadd.f32 %v641, %v671
          %v674 = vadd.f32 %v642, %v672
          %v675 = vmul.f32 %v666, %v651
          %v676 = vmul.f32 %v666, %v652
          %v677 = vadd.f32 %v673, %v675
          %v678 = vadd.f32 %v674, %v676
          %vm679 = vcmp.lt.s32.totalorder %v505, 15
          %vm680 = vcmp.lt.s32.totalorder %v506, 15
          %vm681 = vmand %vm507, %vm679
          %vm682 = vmand %vm508, %vm680
          %s683 = sld [smem:[#allocation6 + $0x2]]
          %s684 = sld [smem:[#allocation10 + $0x2]]
          %685 = vrot.lane.b32.xlu0 %v516, 15
          %v686 = vpop.permute.xlu0 %685
          %687 = vrot.lane.b32.xlu0 %v517, 15
          %v688 = vpop.permute.xlu0 %687
          %vm689 = vcmp.lt.s32.totalorder %v481, 15
          %v690 = vsel %vm689, %v686, %v688
          %v691 = vsel %vm689, %v688, %v686
          %v692 = vsel %vm681, %v691, 0.0
          %v693 = vsel %vm682, %v690, 0.0
          %694 = vrot.lane.b32.xlu0 %v530, 15
          %v695 = vpop.permute.xlu0 %694
          %696 = vrot.lane.b32.xlu0 %v531, 15
          %v697 = vpop.permute.xlu0 %696
          %v698 = vsel %vm689, %v695, %v697
          %v699 = vsel %vm689, %v697, %v695
          %v700 = vsel %vm681, %v699, 0.0
          %v701 = vsel %vm682, %v698, 0.0
          %v702 = vstv %s683
          %v703 = vmul.f32 %v702, %v692
          %v704 = vmul.f32 %v702, %v693
          %v705 = vadd.f32 %v669, %v703
          %v706 = vadd.f32 %v670, %v704
          %v707 = vstv %s684
          %v708 = vmul.f32 %v707, %v700
          %v709 = vmul.f32 %v707, %v701
          %v710 = vsub.f32 %v705, %v708
          %v711 = vsub.f32 %v706, %v709
          %v712 = vmul.f32 %v702, %v700
          %v713 = vmul.f32 %v702, %v701
          %v714 = vadd.f32 %v677, %v712
          %v715 = vadd.f32 %v678, %v713
          %v716 = vmul.f32 %v707, %v692
          %v717 = vmul.f32 %v707, %v693
          %v718 = vadd.f32 %v714, %v716
          %v719 = vadd.f32 %v715, %v717
          %s720 = sld [smem:[#allocation6 + $0xb]]
          %s721 = sld [smem:[#allocation10 + $0xb]]
          %722 = vrot.lane.b32.xlu0 %v563, 15
          %v723 = vpop.permute.xlu0 %722
          %724 = vrot.lane.b32.xlu0 %v564, 15
          %v725 = vpop.permute.xlu0 %724
          %v726 = vsel %vm689, %v723, %v725
          %v727 = vsel %vm689, %v725, %v723
          %v728 = vsel %vm681, %v727, 0.0
          %v729 = vsel %vm682, %v726, 0.0
          %730 = vrot.lane.b32.xlu0 %v576, 15
          %v731 = vpop.permute.xlu0 %730
          %732 = vrot.lane.b32.xlu0 %v577, 15
          %v733 = vpop.permute.xlu0 %732
          %v734 = vsel %vm689, %v731, %v733
          %v735 = vsel %vm689, %v733, %v731
          %v736 = vsel %vm681, %v735, 0.0
          %v737 = vsel %vm682, %v734, 0.0
          %v738 = vstv %s720
          %v739 = vmul.f32 %v738, %v728
          %v740 = vmul.f32 %v738, %v729
          %v741 = vadd.f32 %v710, %v739
          %v742 = vadd.f32 %v711, %v740
          %v743 = vstv %s721
          %v744 = vmul.f32 %v743, %v736
          %v745 = vmul.f32 %v743, %v737
          %v746 = vsub.f32 %v741, %v744
          %v747 = vsub.f32 %v742, %v745
          %v748 = vmul.f32 %v738, %v736
          %v749 = vmul.f32 %v738, %v737
          %v750 = vadd.f32 %v718, %v748
          %v751 = vadd.f32 %v719, %v749
          %v752 = vmul.f32 %v743, %v728
          %v753 = vmul.f32 %v743, %v729
          %v754 = vadd.f32 %v750, %v752
          %v755 = vadd.f32 %v751, %v753
          %s756 = sld [smem:[#allocation6 + $0x3]]
          %s757 = sld [smem:[#allocation10 + $0x3]]
          %758 = vrot.lane.b32.xlu0 %v516, 1
          %v759 = vpop.permute.xlu0 %758
          %760 = vrot.lane.b32.xlu0 %v517, 1
          %v761 = vpop.permute.xlu0 %760
          %vm762 = vcmp.lt.s32.totalorder %v481, 1
          %v763 = vsel %vm762, %v759, %v761
          %v764 = vsel %vm762, %v761, %v759
          %v765 = vsel %vm509, %v764, 0.0
          %v766 = vsel %vm510, %v763, 0.0
          %767 = vrot.lane.b32.xlu0 %v530, 1
          %v768 = vpop.permute.xlu0 %767
          %769 = vrot.lane.b32.xlu0 %v531, 1
          %v770 = vpop.permute.xlu0 %769
          %v771 = vsel %vm762, %v768, %v770
          %v772 = vsel %vm762, %v770, %v768
          %v773 = vsel %vm509, %v772, 0.0
          %v774 = vsel %vm510, %v771, 0.0
          %v775 = vstv %s756
          %v776 = vmul.f32 %v775, %v765
          %v777 = vmul.f32 %v775, %v766
          %v778 = vadd.f32 %v746, %v776
          %v779 = vadd.f32 %v747, %v777
          %v780 = vstv %s757
          %v781 = vmul.f32 %v780, %v773
          %v782 = vmul.f32 %v780, %v774
          %v783 = vsub.f32 %v778, %v781
          %v784 = vsub.f32 %v779, %v782
          %v785 = vmul.f32 %v775, %v773
          %v786 = vmul.f32 %v775, %v774
          %v787 = vadd.f32 %v754, %v785
          %v788 = vadd.f32 %v755, %v786
          %v789 = vmul.f32 %v780, %v765
          %v790 = vmul.f32 %v780, %v766
          %v791 = vadd.f32 %v787, %v789
          %v792 = vadd.f32 %v788, %v790
          %s793 = sld [smem:[#allocation6 + $0xc]]
          %s794 = sld [smem:[#allocation10 + $0xc]]
          %795 = vrot.lane.b32.xlu0 %v563, 1
          %v796 = vpop.permute.xlu0 %795
          %797 = vrot.lane.b32.xlu0 %v564, 1
          %v798 = vpop.permute.xlu0 %797
          %v799 = vsel %vm762, %v796, %v798
          %v800 = vsel %vm762, %v798, %v796
          %v801 = vsel %vm509, %v800, 0.0
          %v802 = vsel %vm510, %v799, 0.0
          %803 = vrot.lane.b32.xlu0 %v576, 1
          %v804 = vpop.permute.xlu0 %803
          %805 = vrot.lane.b32.xlu0 %v577, 1
          %v806 = vpop.permute.xlu0 %805
          %v807 = vsel %vm762, %v804, %v806
          %v808 = vsel %vm762, %v806, %v804
          %v809 = vsel %vm509, %v808, 0.0
          %v810 = vsel %vm510, %v807, 0.0
          %v811 = vstv %s793
          %v812 = vmul.f32 %v811, %v801
          %v813 = vmul.f32 %v811, %v802
          %v814 = vadd.f32 %v783, %v812
          %v815 = vadd.f32 %v784, %v813
          %v816 = vstv %s794
          %v817 = vmul.f32 %v816, %v809
          %v818 = vmul.f32 %v816, %v810
          %v819 = vsub.f32 %v814, %v817
          %v820 = vsub.f32 %v815, %v818
          %v821 = vmul.f32 %v811, %v809
          %v822 = vmul.f32 %v811, %v810
          %v823 = vadd.f32 %v791, %v821
          %v824 = vadd.f32 %v792, %v822
          %v825 = vmul.f32 %v816, %v801
          %v826 = vmul.f32 %v816, %v802
          %v827 = vadd.f32 %v823, %v825
          %v828 = vadd.f32 %v824, %v826
          %s829 = sld [smem:[#allocation6 + $0x4]]
          %s830 = sld [smem:[#allocation10 + $0x4]]
          %v831 = vstv %s829
          %v832 = vmul.f32 %v831, %v475
          %v834 = vperm.slane %v832, 0
          %v835 = vperm.slane %v832, 1
          %v838 = vadd.f32 %v819, %v834
          %v839 = vadd.f32 %v820, %v835
          %v840 = vstv %s830
          %v841 = vmul.f32 %v840, %v477
          %v843 = vperm.slane %v841, 0
          %v844 = vperm.slane %v841, 1
          %v847 = vsub.f32 %v838, %v843
          %v848 = vsub.f32 %v839, %v844
          %v849 = vmul.f32 %v831, %v477
          %v851 = vperm.slane %v849, 0
          %v852 = vperm.slane %v849, 1
          %v855 = vadd.f32 %v827, %v851
          %v856 = vadd.f32 %v828, %v852
          %v857 = vmul.f32 %v840, %v475
          %v859 = vperm.slane %v857, 0
          %v860 = vperm.slane %v857, 1
          %v863 = vadd.f32 %v855, %v859
          %v864 = vadd.f32 %v856, %v860
          %s865 = sld [smem:[#allocation6 + $0xd]]
          %s866 = sld [smem:[#allocation10 + $0xd]]
          %v867 = vstv %s865
          %v868 = vmul.f32 %v867, %v478
          %v870 = vperm.slane %v868, 0
          %v871 = vperm.slane %v868, 1
          %v874 = vadd.f32 %v847, %v870
          %v875 = vadd.f32 %v848, %v871
          %v876 = vstv %s866
          %v877 = vmul.f32 %v876, %v479
          %v879 = vperm.slane %v877, 0
          %v880 = vperm.slane %v877, 1
          %v883 = vsub.f32 %v874, %v879
          %v884 = vsub.f32 %v875, %v880
          %v885 = vmul.f32 %v867, %v479
          %v887 = vperm.slane %v885, 0
          %v888 = vperm.slane %v885, 1
          %v891 = vadd.f32 %v863, %v887
          %v892 = vadd.f32 %v864, %v888
          %v893 = vmul.f32 %v876, %v478
          %v895 = vperm.slane %v893, 0
          %v896 = vperm.slane %v893, 1
          %v899 = vadd.f32 %v891, %v895
          %v900 = vadd.f32 %v892, %v896
          %s901 = sld [smem:[#allocation6 + $0x5]]
          %s902 = sld [smem:[#allocation10 + $0x5]]
          %903 = vrot.lane.b32.xlu0 %v516, 127
          %v904 = vpop.permute.xlu0 %903
          %905 = vrot.lane.b32.xlu0 %v517, 127
          %v906 = vpop.permute.xlu0 %905
          %vm907 = vcmp.lt.s32.totalorder %v481, 127
          %v908 = vsel %vm907, %v904, %v906
          %v909 = vsel %vm907, %v906, %v904
          %v910 = vsel %vm679, %v908, 0.0
          %v911 = vsel %vm680, %v909, 0.0
          %912 = vrot.lane.b32.xlu0 %v530, 127
          %v913 = vpop.permute.xlu0 %912
          %914 = vrot.lane.b32.xlu0 %v531, 127
          %v915 = vpop.permute.xlu0 %914
          %v916 = vsel %vm907, %v913, %v915
          %v917 = vsel %vm907, %v915, %v913
          %v918 = vsel %vm679, %v916, 0.0
          %v919 = vsel %vm680, %v917, 0.0
          %v920 = vstv %s901
          %v921 = vmul.f32 %v920, %v910
          %v922 = vmul.f32 %v920, %v911
          %v923 = vadd.f32 %v883, %v921
          %v924 = vadd.f32 %v884, %v922
          %v925 = vstv %s902
          %v926 = vmul.f32 %v925, %v918
          %v927 = vmul.f32 %v925, %v919
          %v928 = vsub.f32 %v923, %v926
          %v929 = vsub.f32 %v924, %v927
          %v930 = vmul.f32 %v920, %v918
          %v931 = vmul.f32 %v920, %v919
          %v932 = vadd.f32 %v899, %v930
          %v933 = vadd.f32 %v900, %v931
          %v934 = vmul.f32 %v925, %v910
          %v935 = vmul.f32 %v925, %v911
          %v936 = vadd.f32 %v932, %v934
          %v937 = vadd.f32 %v933, %v935
          %s938 = sld [smem:[#allocation6 + $0xe]]
          %s939 = sld [smem:[#allocation10 + $0xe]]
          %940 = vrot.lane.b32.xlu0 %v563, 127
          %v941 = vpop.permute.xlu0 %940
          %942 = vrot.lane.b32.xlu0 %v564, 127
          %v943 = vpop.permute.xlu0 %942
          %v944 = vsel %vm907, %v941, %v943
          %v945 = vsel %vm907, %v943, %v941
          %v946 = vsel %vm679, %v944, 0.0
          %v947 = vsel %vm680, %v945, 0.0
          %948 = vrot.lane.b32.xlu0 %v576, 127
          %v949 = vpop.permute.xlu0 %948
          %950 = vrot.lane.b32.xlu0 %v577, 127
          %v951 = vpop.permute.xlu0 %950
          %v952 = vsel %vm907, %v949, %v951
          %v953 = vsel %vm907, %v951, %v949
          %v954 = vsel %vm679, %v952, 0.0
          %v955 = vsel %vm680, %v953, 0.0
          %v956 = vstv %s938
          %v957 = vmul.f32 %v956, %v946
          %v958 = vmul.f32 %v956, %v947
          %v959 = vadd.f32 %v928, %v957
          %v960 = vadd.f32 %v929, %v958
          %v961 = vstv %s939
          %v962 = vmul.f32 %v961, %v954
          %v963 = vmul.f32 %v961, %v955
          %v964 = vsub.f32 %v959, %v962
          %v965 = vsub.f32 %v960, %v963
          %v966 = vmul.f32 %v956, %v954
          %v967 = vmul.f32 %v956, %v955
          %v968 = vadd.f32 %v936, %v966
          %v969 = vadd.f32 %v937, %v967
          %v970 = vmul.f32 %v961, %v946
          %v971 = vmul.f32 %v961, %v947
          %v972 = vadd.f32 %v968, %v970
          %v973 = vadd.f32 %v969, %v971
          %vm974 = vcmp.lt.s32.totalorder %v481, 240
          %vm975 = vcmp.lt.s32.totalorder %v482, 240
          %vm976 = vmand %vm974, %vm509
          %vm977 = vmand %vm975, %vm510
          %s978 = sld [smem:[#allocation6 + $0x6]]
          %s979 = sld [smem:[#allocation10 + $0x6]]
          %980 = vrot.lane.b32.xlu0 %v516, 113
          %v981 = vpop.permute.xlu0 %980
          %982 = vrot.lane.b32.xlu0 %v517, 113
          %v983 = vpop.permute.xlu0 %982
          %vm984 = vcmp.lt.s32.totalorder %v481, 113
          %v985 = vsel %vm984, %v981, %v983
          %v986 = vsel %vm984, %v983, %v981
          %v987 = vsel %vm976, %v985, 0.0
          %v988 = vsel %vm977, %v986, 0.0
          %989 = vrot.lane.b32.xlu0 %v530, 113
          %v990 = vpop.permute.xlu0 %989
          %991 = vrot.lane.b32.xlu0 %v531, 113
          %v992 = vpop.permute.xlu0 %991
          %v993 = vsel %vm984, %v990, %v992
          %v994 = vsel %vm984, %v992, %v990
          %v995 = vsel %vm976, %v993, 0.0
          %v996 = vsel %vm977, %v994, 0.0
          %v997 = vstv %s978
          %v998 = vmul.f32 %v997, %v987
          %v999 = vmul.f32 %v997, %v988
          %v1000 = vadd.f32 %v964, %v998
          %v1001 = vadd.f32 %v965, %v999
          %v1002 = vstv %s979
          %v1003 = vmul.f32 %v1002, %v995
          %v1004 = vmul.f32 %v1002, %v996
          %v1005 = vsub.f32 %v1000, %v1003
          %v1006 = vsub.f32 %v1001, %v1004
          %v1007 = vmul.f32 %v997, %v995
          %v1008 = vmul.f32 %v997, %v996
          %v1009 = vadd.f32 %v972, %v1007
          %v1010 = vadd.f32 %v973, %v1008
          %v1011 = vmul.f32 %v1002, %v987
          %v1012 = vmul.f32 %v1002, %v988
          %v1013 = vadd.f32 %v1009, %v1011
          %v1014 = vadd.f32 %v1010, %v1012
          %s1015 = sld [smem:[#allocation6 + $0xf]]
          %s1016 = sld [smem:[#allocation10 + $0xf]]
          %1017 = vrot.lane.b32.xlu0 %v563, 113
          %v1018 = vpop.permute.xlu0 %1017
          %1019 = vrot.lane.b32.xlu0 %v564, 113
          %v1020 = vpop.permute.xlu0 %1019
          %v1021 = vsel %vm984, %v1018, %v1020
          %v1022 = vsel %vm984, %v1020, %v1018
          %v1023 = vsel %vm976, %v1021, 0.0
          %v1024 = vsel %vm977, %v1022, 0.0
          %1025 = vrot.lane.b32.xlu0 %v576, 113
          %v1026 = vpop.permute.xlu0 %1025
          %1027 = vrot.lane.b32.xlu0 %v577, 113
          %v1028 = vpop.permute.xlu0 %1027
          %v1029 = vsel %vm984, %v1026, %v1028
          %v1030 = vsel %vm984, %v1028, %v1026
          %v1031 = vsel %vm976, %v1029, 0.0
          %v1032 = vsel %vm977, %v1030, 0.0
          %v1033 = vstv %s1015
          %v1034 = vmul.f32 %v1033, %v1023
          %v1035 = vmul.f32 %v1033, %v1024
          %v1036 = vadd.f32 %v1005, %v1034
          %v1037 = vadd.f32 %v1006, %v1035
          %v1038 = vstv %s1016
          %v1039 = vmul.f32 %v1038, %v1031
          %v1040 = vmul.f32 %v1038, %v1032
          %v1041 = vsub.f32 %v1036, %v1039
          %v1042 = vsub.f32 %v1037, %v1040
          %v1043 = vmul.f32 %v1033, %v1031
          %v1044 = vmul.f32 %v1033, %v1032
          %v1045 = vadd.f32 %v1013, %v1043
          %v1046 = vadd.f32 %v1014, %v1044
          %v1047 = vmul.f32 %v1038, %v1023
          %v1048 = vmul.f32 %v1038, %v1024
          %v1049 = vadd.f32 %v1045, %v1047
          %v1050 = vadd.f32 %v1046, %v1048
          %s1051 = sld [smem:[#allocation6 + $0x7]]
          %s1052 = sld [smem:[#allocation10 + $0x7]]
          %1053 = vrot.lane.b32.xlu0 %v516, 112
          %v1054 = vpop.permute.xlu0 %1053
          %1055 = vrot.lane.b32.xlu0 %v517, 112
          %v1056 = vpop.permute.xlu0 %1055
          %vm1057 = vcmp.lt.s32.totalorder %v481, 112
          %v1058 = vsel %vm1057, %v1054, %v1056
          %v1059 = vsel %vm1057, %v1056, %v1054
          %v1060 = vsel %vm974, %v1058, 0.0
          %v1061 = vsel %vm975, %v1059, 0.0
          %1062 = vrot.lane.b32.xlu0 %v530, 112
          %v1063 = vpop.permute.xlu0 %1062
          %1064 = vrot.lane.b32.xlu0 %v531, 112
          %v1065 = vpop.permute.xlu0 %1064
          %v1066 = vsel %vm1057, %v1063, %v1065
          %v1067 = vsel %vm1057, %v1065, %v1063
          %v1068 = vsel %vm974, %v1066, 0.0
          %v1069 = vsel %vm975, %v1067, 0.0
          %v1070 = vstv %s1051
          %v1071 = vmul.f32 %v1070, %v1060
          %v1072 = vmul.f32 %v1070, %v1061
          %v1073 = vadd.f32 %v1041, %v1071
          %v1074 = vadd.f32 %v1042, %v1072
          %v1075 = vstv %s1052
          %v1076 = vmul.f32 %v1075, %v1068
          %v1077 = vmul.f32 %v1075, %v1069
          %v1078 = vsub.f32 %v1073, %v1076
          %v1079 = vsub.f32 %v1074, %v1077
          %v1080 = vmul.f32 %v1070, %v1068
          %v1081 = vmul.f32 %v1070, %v1069
          %v1082 = vadd.f32 %v1049, %v1080
          %v1083 = vadd.f32 %v1050, %v1081
          %v1084 = vmul.f32 %v1075, %v1060
          %v1085 = vmul.f32 %v1075, %v1061
          %v1086 = vadd.f32 %v1082, %v1084
          %v1087 = vadd.f32 %v1083, %v1085
          %s1088 = sld [smem:[#allocation6 + $0x10]]
          %s1089 = sld [smem:[#allocation10 + $0x10]]
          %1090 = vrot.lane.b32.xlu0 %v563, 112
          %v1091 = vpop.permute.xlu0 %1090
          %1092 = vrot.lane.b32.xlu0 %v564, 112
          %v1093 = vpop.permute.xlu0 %1092
          %v1094 = vsel %vm1057, %v1091, %v1093
          %v1095 = vsel %vm1057, %v1093, %v1091
          %v1096 = vsel %vm974, %v1094, 0.0
          %v1097 = vsel %vm975, %v1095, 0.0
          %1098 = vrot.lane.b32.xlu0 %v576, 112
          %v1099 = vpop.permute.xlu0 %1098
          %1100 = vrot.lane.b32.xlu0 %v577, 112
          %v1101 = vpop.permute.xlu0 %1100
          %v1102 = vsel %vm1057, %v1099, %v1101
          %v1103 = vsel %vm1057, %v1101, %v1099
          %v1104 = vsel %vm974, %v1102, 0.0
          %v1105 = vsel %vm975, %v1103, 0.0
          %v1106 = vstv %s1088
          %v1107 = vmul.f32 %v1106, %v1096
          %v1108 = vmul.f32 %v1106, %v1097
          %v1109 = vadd.f32 %v1078, %v1107
          %v1110 = vadd.f32 %v1079, %v1108
          %v1111 = vstv %s1089
          %v1112 = vmul.f32 %v1111, %v1104
          %v1113 = vmul.f32 %v1111, %v1105
          %v1114 = vsub.f32 %v1109, %v1112
          %v1115 = vsub.f32 %v1110, %v1113
          %v1116 = vmul.f32 %v1106, %v1104
          %v1117 = vmul.f32 %v1106, %v1105
          %v1118 = vadd.f32 %v1086, %v1116
          %v1119 = vadd.f32 %v1087, %v1117
          %v1120 = vmul.f32 %v1111, %v1096
          %v1121 = vmul.f32 %v1111, %v1097
          %v1122 = vadd.f32 %v1118, %v1120
          %v1123 = vadd.f32 %v1119, %v1121
          %vm1124 = vmand %vm974, %vm679
          %vm1125 = vmand %vm975, %vm680
          %s1126 = sld [smem:[#allocation6 + $0x8]]
          %s1127 = sld [smem:[#allocation10 + $0x8]]
          %1128 = vrot.lane.b32.xlu0 %v516, 111
          %v1129 = vpop.permute.xlu0 %1128
          %1130 = vrot.lane.b32.xlu0 %v517, 111
          %v1131 = vpop.permute.xlu0 %1130
          %vm1132 = vcmp.lt.s32.totalorder %v481, 111
          %v1133 = vsel %vm1132, %v1129, %v1131
          %v1134 = vsel %vm1132, %v1131, %v1129
          %v1135 = vsel %vm1124, %v1133, 0.0
          %v1136 = vsel %vm1125, %v1134, 0.0
          %1137 = vrot.lane.b32.xlu0 %v530, 111
          %v1138 = vpop.permute.xlu0 %1137
          %1139 = vrot.lane.b32.xlu0 %v531, 111
          %v1140 = vpop.permute.xlu0 %1139
          %v1141 = vsel %vm1132, %v1138, %v1140
          %v1142 = vsel %vm1132, %v1140, %v1138
          %v1143 = vsel %vm1124, %v1141, 0.0
          %v1144 = vsel %vm1125, %v1142, 0.0
          %v1145 = vstv %s1126
          %v1146 = vmul.f32 %v1145, %v1135
          %v1147 = vmul.f32 %v1145, %v1136
          %v1148 = vadd.f32 %v1114, %v1146
          %v1149 = vadd.f32 %v1115, %v1147
          %v1150 = vstv %s1127
          %v1151 = vmul.f32 %v1150, %v1143
          %v1152 = vmul.f32 %v1150, %v1144
          %v1153 = vsub.f32 %v1148, %v1151
          %v1154 = vsub.f32 %v1149, %v1152
          %v1155 = vmul.f32 %v1145, %v1143
          %v1156 = vmul.f32 %v1145, %v1144
          %v1157 = vadd.f32 %v1122, %v1155
          %v1158 = vadd.f32 %v1123, %v1156
          %v1159 = vmul.f32 %v1150, %v1135
          %v1160 = vmul.f32 %v1150, %v1136
          %v1161 = vadd.f32 %v1157, %v1159
          %v1162 = vadd.f32 %v1158, %v1160
          %s1163 = sld [smem:[#allocation6 + $0x11]]
          %s1164 = sld [smem:[#allocation10 + $0x11]]
          %1165 = vrot.lane.b32.xlu0 %v563, 111
          %v1166 = vpop.permute.xlu0 %1165
          %1167 = vrot.lane.b32.xlu0 %v564, 111
          %v1168 = vpop.permute.xlu0 %1167
          %v1169 = vsel %vm1132, %v1166, %v1168
          %v1170 = vsel %vm1132, %v1168, %v1166
          %v1171 = vsel %vm1124, %v1169, 0.0
          %v1172 = vsel %vm1125, %v1170, 0.0
          %1173 = vrot.lane.b32.xlu0 %v576, 111
          %v1174 = vpop.permute.xlu0 %1173
          %1175 = vrot.lane.b32.xlu0 %v577, 111
          %v1176 = vpop.permute.xlu0 %1175
          %v1177 = vsel %vm1132, %v1174, %v1176
          %v1178 = vsel %vm1132, %v1176, %v1174
          %v1179 = vsel %vm1124, %v1177, 0.0
          %v1180 = vsel %vm1125, %v1178, 0.0
          %v1181 = vstv %s1163
          %v1182 = vmul.f32 %v1181, %v1171
          %v1183 = vmul.f32 %v1181, %v1172
          %v1184 = vadd.f32 %v1153, %v1182
          %v1185 = vadd.f32 %v1154, %v1183
          %v1186 = vstv %s1164
          %v1187 = vmul.f32 %v1186, %v1179
          %v1188 = vmul.f32 %v1186, %v1180
          %v1189 = vsub.f32 %v1184, %v1187
          %v1190 = vsub.f32 %v1185, %v1188
          %v1191 = vmul.f32 %v1181, %v1179
          %v1192 = vmul.f32 %v1181, %v1180
          %v1193 = vadd.f32 %v1161, %v1191
          %v1194 = vadd.f32 %v1162, %v1192
          %v1195 = vmul.f32 %v1186, %v1171
          %v1196 = vmul.f32 %v1186, %v1172
          %v1197 = vadd.f32 %v1193, %v1195
          %v1198 = vadd.f32 %v1194, %v1196
          %v1199 = vxor.u32 %v1189, 2147483648
          %v1200 = vxor.u32 %v1190, 2147483648
          %v1201 = vmul.f32 %v1199, 1.442695
          %v1202 = vpow.pop %v1201
          %v1203 = vmul.f32 %v1200, 1.442695
          %v1204 = vpow.pop %v1203
          %v1205 = vadd.f32 %v1202, 1.0
          %v1206 = vadd.f32 %v1204, 1.0
          %v1207 = vrcp.pop %v1205
          %v1208 = vmul.f32 %v1205, %v1207
          %v1209 = vsub.f32 1.0, %v1208
          %v1210 = vmul.f32 %v1207, %v1209
          %v1211 = vadd.f32 %v1207, %v1210
          %vm1212 = vweird.f32 %v1205
          %vm1213 = vweird.f32 %v1207
          %vm1214 = vmor %vm1212, %vm1213
          %v1215 = vsel %vm1214, %v1207, %v1211
          %v1216 = vand.u32 2147483647, %v1205
          %vm1217 = vcmp.eq.f32.partialorder %v1216, 8.507059e+37
          %v1218 = vand.u32 %v1205, 2147483648
          %v1219 = vor.u32 1.1754944e-38, %v1218
          %v1220 = vsel %vm1217, %v1219, %v1215
          %v1221 = vmul.f32 1.0, %v1220
          %v1222 = vrcp.pop %v1206
          %v1223 = vmul.f32 %v1206, %v1222
          %v1224 = vsub.f32 1.0, %v1223
          %v1225 = vmul.f32 %v1222, %v1224
          %v1226 = vadd.f32 %v1222, %v1225
          %vm1227 = vweird.f32 %v1206
          %vm1228 = vweird.f32 %v1222
          %vm1229 = vmor %vm1227, %vm1228
          %v1230 = vsel %vm1229, %v1222, %v1226
          %v1231 = vand.u32 2147483647, %v1206
          %vm1232 = vcmp.eq.f32.partialorder %v1231, 8.507059e+37
          %v1233 = vand.u32 %v1206, 2147483648
          %v1234 = vor.u32 1.1754944e-38, %v1233
          %v1235 = vsel %vm1232, %v1234, %v1230
          %v1236 = vmul.f32 1.0, %v1235
          %v1239 = vrot.slane %v1236, 7
          %v1240 = vsel %vm380, %v1221, %v1239
          %1242 = vst.msk [vmem:[%s333] sm:$0x3] %vm387, %v1240
          %v1243 = vxor.u32 %v1197, 2147483648
          %v1244 = vxor.u32 %v1198, 2147483648
          %v1245 = vmul.f32 %v1243, 1.442695
          %v1246 = vpow.pop %v1245
          %v1247 = vmul.f32 %v1244, 1.442695
          %v1248 = vpow.pop %v1247
          %v1249 = vadd.f32 %v1246, 1.0
          %v1250 = vadd.f32 %v1248, 1.0
          %v1251 = vrcp.pop %v1249
          %v1252 = vmul.f32 %v1249, %v1251
          %v1253 = vsub.f32 1.0, %v1252
          %v1254 = vmul.f32 %v1251, %v1253
          %v1255 = vadd.f32 %v1251, %v1254
          %vm1256 = vweird.f32 %v1249
          %vm1257 = vweird.f32 %v1251
          %vm1258 = vmor %vm1256, %vm1257
          %v1259 = vsel %vm1258, %v1251, %v1255
          %v1260 = vand.u32 2147483647, %v1249
          %vm1261 = vcmp.eq.f32.partialorder %v1260, 8.507059e+37
          %v1262 = vand.u32 %v1249, 2147483648
          %v1263 = vor.u32 1.1754944e-38, %v1262
          %v1264 = vsel %vm1261, %v1263, %v1259
          %v1265 = vmul.f32 1.0, %v1264
          %v1266 = vrcp.pop %v1250
          %v1267 = vmul.f32 %v1250, %v1266
          %v1268 = vsub.f32 1.0, %v1267
          %v1269 = vmul.f32 %v1266, %v1268
          %v1270 = vadd.f32 %v1266, %v1269
          %vm1271 = vweird.f32 %v1250
          %vm1272 = vweird.f32 %v1266
          %vm1273 = vmor %vm1271, %vm1272
          %v1274 = vsel %vm1273, %v1266, %v1270
          %v1275 = vand.u32 2147483647, %v1250
          %vm1276 = vcmp.eq.f32.partialorder %v1275, 8.507059e+37
          %v1277 = vand.u32 %v1250, 2147483648
          %v1278 = vor.u32 1.1754944e-38, %v1277
          %v1279 = vsel %vm1276, %v1278, %v1274
          %v1280 = vmul.f32 1.0, %v1279
          %v1283 = vrot.slane %v1280, 7
          %v1284 = vsel %vm380, %v1265, %v1283
          %1286 = vst.msk [vmem:[%s340] sm:$0x3] %vm387, %v1284
        $region60: #{tpu_custom_call.1} parent=35 // pred_fallthru
          _
        %s1287 = sand.u32 %s149, 1
        %s1288 = scalar_lea.sflag [#allocation8], %s1287
        %s1289 = sand.u32 %s149, 1
        %s1290 = smul.addr %s1289, 2
        %s1291 = scalar_lea.vmem [#allocation15], %s1290
        %s1292 = sand.u32 %s175, 1
        %s1293 = scalar_lea.sflag [#allocation17], %s1292
        %s1294 = sand.u32 %s175, 1
        %s1295 = smul.addr %s1294, 2
        %s1296 = scalar_lea.vmem [#allocation16], %s1295
        // Predicated region
        $region61: #{tpu_custom_call.1} parent=35 // pred_check
          %p1297 = pneg %p159
        $region62: #{tpu_custom_call.1} parent=35 // pred_check_branch
          %1299 = sbr.rel (%p1297) target = $region64
        $region63: #{tpu_custom_call.1} parent=35 // pred_region
          %1301 = vsyncadd %s1288, 0
          %s1302 = smul.addr %s35, 2
          %s1303 = scalar_lea.hbm %s4, %s1302
          %s1305 = sshll.u32 %s1291, 4
          %s1306 = int_to_ptr.vmem [resolvable:$true] %s1305
          %s1307 = sshll.u32 %s1303, 4
          %s1308 = int_to_ptr.hbm [resolvable:$true] %s1307
          %1310 = dma.vmem_to_hbm [thread:$0]  %s1306, 32, %s1308, %s1288
        $region64: #{tpu_custom_call.1} parent=35 // pred_fallthru
          _
        // Predicated region
        $region65: #{tpu_custom_call.1} parent=35 // pred_check
          %p1311 = pneg %p185
        $region66: #{tpu_custom_call.1} parent=35 // pred_check_branch
          %1313 = sbr.rel (%p1311) target = $region68
        $region67: #{tpu_custom_call.1} parent=35 // pred_region
          %1315 = vsyncadd %s1293, 0
          %s1316 = smul.addr %s35, 2
          %s1317 = scalar_lea.hbm %s5, %s1316
          %s1319 = sshll.u32 %s1296, 4
          %s1320 = int_to_ptr.vmem [resolvable:$true] %s1319
          %s1321 = sshll.u32 %s1317, 4
          %s1322 = int_to_ptr.hbm [resolvable:$true] %s1321
          %1324 = dma.vmem_to_hbm [thread:$0]  %s1320, 32, %s1322, %s1293
        $region68: #{tpu_custom_call.1} parent=35 // pred_fallthru
          _
      $region36: #{tpu_custom_call.1} parent=5 // pred_fallthru
        _
      %p1325 = scmp.le.s32.totalorder 2, %s26
      // Predicated region
      $region69: #{tpu_custom_call.1} parent=5 // pred_check
        %p1326 = pneg %p1325
      $region70: #{tpu_custom_call.1} parent=5 // pred_check_branch
        %1328 = sbr.rel (%p1326) target = $region72
      $region71: #{tpu_custom_call.1} parent=5 // pred_region
        %s1329 = ssub.s32 %s26, 2
        // Predicated region
        $region73: #{tpu_custom_call.1} parent=71 // pred_check
          %p1330 = pneg %p165
        $region74: #{tpu_custom_call.1} parent=71 // pred_check_branch
          %1332 = sbr.rel (%p1330) target = $region76
        $region75: #{tpu_custom_call.1} parent=71 // pred_region
          %s1333 = sand.u32 %s150, 1
          %s1334 = scalar_lea.sflag [#allocation8], %s1333
          %s1335 = sand.u32 %s150, 1
          %s1336 = smul.addr %s1335, 2
          %s1337 = scalar_lea.vmem [#allocation15], %s1336
          %1339 = dma.done %s1334, 32
        $region76: #{tpu_custom_call.1} parent=71 // pred_fallthru
          _
        // Predicated region
        $region77: #{tpu_custom_call.1} parent=71 // pred_check
          %p1340 = pneg %p191
        $region78: #{tpu_custom_call.1} parent=71 // pred_check_branch
          %1342 = sbr.rel (%p1340) target = $region80
        $region79: #{tpu_custom_call.1} parent=71 // pred_region
          %s1343 = sand.u32 %s176, 1
          %s1344 = scalar_lea.sflag [#allocation17], %s1343
          %s1345 = sand.u32 %s176, 1
          %s1346 = smul.addr %s1345, 2
          %s1347 = scalar_lea.vmem [#allocation16], %s1346
          %1349 = dma.done %s1344, 32
        $region80: #{tpu_custom_call.1} parent=71 // pred_fallthru
          _
      $region72: #{tpu_custom_call.1} parent=5 // pred_fallthru
        _
    $region6: #{tpu_custom_call.1} parent=1 // loop_footer
      %s30 = sadd.s32 1, %s26
    $region7: #{tpu_custom_call.1} parent=1 // loop_footer_branch
      %25 = sbr.rel target = $region3
    $region8: #{tpu_custom_call.1} parent=1 // loop_exit
      _
    %1350 = vsyncpa [#allocation7], 1
    %s1351 = scalar_lea.sflag [#allocation7], 1
    %1352 = vsyncpa %s1351, 1
    %1353 = vsyncpa [#allocation14], 1
    %s1354 = scalar_lea.sflag [#allocation14], 1
    %1355 = vsyncpa %s1354, 1
    %1356 = vsyncpa [#allocation8], 1
    %s1357 = scalar_lea.sflag [#allocation8], 1
    %1358 = vsyncpa %s1357, 1
    %1359 = vsyncpa [#allocation17], 1
    %s1360 = scalar_lea.sflag [#allocation17], 1
    %1361 = vsyncpa %s1360, 1
    %1362 = vsyncpa [#allocation9], 1
    %s1363 = scalar_lea.sflag [#allocation9], 1
    %1364 = vsyncpa %s1363, 1
    %1365 = vsyncpa [#allocation11], 1

</llo_original>
